<compile_context>
chip_gen: v5e
topology: v5e:2x2
jax: 0.10.0
libtpu: 0.0.40
codegen_flags: <defaults>
</compile_context>

<pallas_src>
import functools

import jax
import jax.numpy as jnp
from jax import lax
from jax.experimental import pallas as pl
from jax.experimental.pallas import tpu as pltpu


def _round_up(a: int, b: int) -> int:
    return ((a + b - 1) // b) * b


def _vmem_budget_bytes() -> int:
    """Per-generation scoped-VMEM budget (~7/8 of physical capacity)."""
    cap = 64 * 1024 * 1024  # conservative fallback (v7x-sized)
    try:
        info = pltpu.get_tpu_info()
        cap = int(getattr(info, "vmem_capacity_bytes", cap))
    except Exception:
        pass
    # 64 MiB (v7x) -> 56 MiB; 128 MiB (v5e/v6e) -> 112 MiB.  Headroom is left
    # for Mosaic internal scratch, semaphores and pipelining slop.
    return (cap * 7) // 8


def _tree_max(vals):
    """Pairwise max reduction: serial VPU dependency ~log2(K) instead of K."""
    while len(vals) > 1:
        nxt = [jnp.maximum(a, b) for a, b in zip(vals[0::2], vals[1::2])]
        if len(vals) % 2:
            nxt.append(vals[-1])
        vals = nxt
    return vals[0]


def _pool_rows(x_ref, o_ref, read_index, *, tm, k_max):
    """Max-pool the `tm` output rows of the current (d-strip, row-tile) block.

    read_index(off) returns the int32 pooling index at flat offset `off`
    within this row tile (off in [0, tm * k_max)).
    """

    def group_body(g, carry):
        # Build 8 output rows in vregs (native dtype; max is order-preserving),
        # then write them with a single full-sublane (8, TD) unmasked store.
        rows = []
        for r in range(8):                       # static unroll: 8 rows/group
            off = (g * 8 + r) * k_max
            gathered = [
                x_ref[pl.ds(read_index(off + k), 1), :] for k in range(k_max)
            ]
            rows.append(_tree_max(gathered))
        tile = jnp.concatenate(rows, axis=0)     # (8, TD)
        base = pl.multiple_of(g * 8, 8)
        o_ref[pl.ds(base, 8), :] = tile
        return carry

    lax.fori_loop(0, tm // 8, group_body, 0)


def _max_pool_kernel_prefetch(inds_smem, x_ref, o_ref, *, tm, k_max):
    """Small-index path: all pooling indices resident in SMEM (scalar prefetch)."""
    i = pl.program_id(1)                         # row-tile index (inner axis)
    base = i * (tm * k_max)
    _pool_rows(x_ref, o_ref, lambda off: inds_smem[base + off],
               tm=tm, k_max=k_max)


def _max_pool_kernel_dma(inds_hbm, x_ref, o_ref, inds_smem, sem, *, tm, k_max):
    """Large-index path: indices stay in HBM, per-tile slices double-buffered
    into a 1-D SMEM scratch so the small DMA is hidden behind compute."""
    i = pl.program_id(1)                         # row-tile index (inner axis)
    nrows = pl.num_programs(1)
    blk = tm * k_max

    def copy(tile, slot):                        # `slot` is a static python int
        return pltpu.make_async_copy(
            inds_hbm.at[pl.ds(tile * blk, blk)],
            inds_smem.at[pl.ds(slot * blk, blk)],
            sem.at[slot])

    # Prime the pipeline at the start of each d-strip (self-contained per
    # strip, so any megacore partitioning of the outer axis stays correct).
    @pl.when(i == 0)
    def _():
        copy(0, 0).start()

    # Prefetch the next row tile's indices; overlaps with this tile's compute.
    nxt_is_even = lax.rem(i + 1, 2) == 0

    @pl.when(jnp.logical_and(i + 1 < nrows, nxt_is_even))
    def _():
        copy(i + 1, 0).start()

    @pl.when(jnp.logical_and(i + 1 < nrows, jnp.logical_not(nxt_is_even)))
    def _():
        copy(i + 1, 1).start()

    # Wait for this tile's indices (slot = i % 2).
    cur_is_even = lax.rem(i, 2) == 0

    @pl.when(cur_is_even)
    def _():
        copy(i, 0).wait()

    @pl.when(jnp.logical_not(cur_is_even))
    def _():
        copy(i, 1).wait()

    base = lax.rem(i, 2) * blk
    _pool_rows(x_ref, o_ref, lambda off: inds_smem[base + off],
               tm=tm, k_max=k_max)


def max_pool_pallas(x, inds, *, tm_max=512, prefetch_indices=None):
    """Pallas equivalent of KPConv max_pool(x, inds)."""
    n1, d = x.shape
    n2, k_max = inds.shape
    itemsize = jnp.dtype(x.dtype).itemsize

    # Lane-dense feature padding (multiple of 128), zero shadow row (index n1),
    # sublane padding of the point count.
    dp = _round_up(d, 128)
    n1p = _round_up(n1 + 1, 8)
    x_pad = jnp.zeros((n1p, dp), dtype=x.dtype).at[:n1, :d].set(x)

    budget = _vmem_budget_bytes()

    # Row tile: large to amortize per-step overhead and per-tile index fetches.
    tm = min(tm_max, _round_up(n2, 8))

    # strip_bufs resident x-strip copies + double-buffered output tile + slack.
    def vmem_need(td_, tm_, strip_bufs):
        return (strip_bufs * n1p * td_ + 2 * tm_ * td_) * itemsize + (2 << 20)

    # Feature strip width: widest 128-multiple that fits the budget with a
    # single-buffered strip (prefer >= 512 lanes; don't default to 128).
    cands = []
    for c in (dp, 512, 384, 256, 128):
        if c <= dp and dp % c == 0 and c not in cands:
            cands.append(c)
    td = cands[-1]
    for c in cands:
        if vmem_need(c, tm, 1) <= budget:
            td = c
            break
    # TODO(synk): if even the 128-lane single-buffered strip exceeds the VMEM
    # budget (very large n1), keep x in HBM (pl.ANY) and DMA-gather the K rows
    # per output group into a double-buffered VMEM scratch instead.

    # Guarantee >= 2 grid steps along a parallel axis (v7x has 2 TensorCores).
    if dp // td == 1 and _round_up(n2, 8) >= 16:
        tm = min(tm, _round_up((n2 + 1) // 2, 8))

    n2p = _round_up(n2, tm)
    grid = (dp // td, n2p // tm)   # d strips OUTER -> x strip DMA'd once per strip

    # Pad pooled-row count; padded rows gather only the zero shadow row.
    inds_p = jnp.full((n2p, k_max), n1, dtype=jnp.int32)
    inds_p = inds_p.at[:n2, :].set(inds.astype(jnp.int32))
    inds_flat = inds_p.reshape(-1)

    if prefetch_indices is None:
        prefetch_indices = n2p * k_max * 4 <= 256 * 1024   # fits SMEM comfortably

    out_shape = jax.ShapeDtypeStruct((n2p, dp), x.dtype)

    def build(single_buffer_strip):
        strip_kwargs = (
            dict(pipeline_mode=pl.Buffered(1)) if single_buffer_strip else {})
        strip_bufs = 1 if single_buffer_strip else 2
        vmem_limit = int(min(max(vmem_need(td, tm, strip_bufs), 32 << 20), budget))

        if prefetch_indices:
            kernel = functools.partial(_max_pool_kernel_prefetch,
                                       tm=tm, k_max=k_max)
            grid_spec = pltpu.PrefetchScalarGridSpec(
                num_scalar_prefetch=1,
                grid=grid,
                in_specs=[pl.BlockSpec((n1p, td), lambda j, i, inds: (0, j),
                                       **strip_kwargs)],
                out_specs=pl.BlockSpec((tm, td), lambda j, i, inds: (i, j)),
            )
            dim_sem = ("parallel", "parallel")
        else:
            kernel = functools.partial(_max_pool_kernel_dma, tm=tm, k_max=k_max)
            grid_spec = pltpu.PrefetchScalarGridSpec(
                num_scalar_prefetch=0,
                grid=grid,
                in_specs=[
                    pl.BlockSpec(memory_space=pl.ANY),        # indices in HBM
                    pl.BlockSpec((n1p, td), lambda j, i: (0, j), **strip_kwargs),
                ],
                out_specs=pl.BlockSpec((tm, td), lambda j, i: (i, j)),
                scratch_shapes=[
                    pltpu.SMEM((2 * tm * k_max,), jnp.int32),  # 2 index slots
                    pltpu.SemaphoreType.DMA((2,)),
                ],
            )
            # Inner row axis carries the manual DMA pipeline -> keep sequential.
            dim_sem = ("parallel", "arbitrary")

        return pl.pallas_call(
            kernel,
            out_shape=out_shape,
            grid_spec=grid_spec,
            compiler_params=pltpu.CompilerParams(
                dimension_semantics=dim_sem,
                vmem_limit_bytes=vmem_limit,
            ),
        )

    try:
        out = build(single_buffer_strip=True)(inds_flat, x_pad)
    except Exception:
        # Defensive fallback: double-buffered strip (costs VMEM, never
        # correctness) in case Buffered(1) is rejected by this toolchain.
        out = build(single_buffer_strip=False)(inds_flat, x_pad)

    return out[:n2, :d]


class MaxPoolBlock:
    """Mirror of the PyTorch MaxPoolBlock module (no learnable parameters)."""

    def __init__(self, layer_ind):
        self.layer_ind = layer_ind

    def __call__(self, x, pools):
        # `pools` mirrors `batch.pools`; select layer_ind + 1 as in torch.
        return max_pool_pallas(x, pools[self.layer_ind + 1])


if __name__ == "__main__":
    key = jax.random.PRNGKey(0)
    k_x, k_i = jax.random.split(key)

    n1, d = 200, 96    # input points, feature dim (d < 128 exercises lane padding)
    n2, K = 300, 6     # pooled points, neighbors per pooled point

    x = jax.random.normal(k_x, (n1, d), dtype=jnp.float32)
    # indices in [0, n1] -- value n1 hits the zero shadow row
    inds = jax.random.randint(k_i, (n2, K), 0, n1 + 1, dtype=jnp.int32)

    # Pure-JAX reference for correctness.
    x_pad_ref = jnp.concatenate([x, jnp.zeros((1, d), x.dtype)], axis=0)
    ref = jnp.max(x_pad_ref[inds], axis=1)

    # batch.pools[layer_ind + 1] == inds  for layer_ind = 0
    block = MaxPoolBlock(layer_ind=0)
    out = jax.block_until_ready(block(x, pools=[None, inds]))
    assert out.shape == (n2, d)
    assert jnp.allclose(out, ref, atol=1e-6), "scalar-prefetch path mismatch"

    # Also exercise the large-index path (HBM indices + double-buffered SMEM DMA).
    out_dma = jax.block_until_ready(
        max_pool_pallas(x, inds, prefetch_indices=False))
    assert jnp.allclose(out_dma, ref, atol=1e-6), "DMA-pipelined path mismatch"

    print("KERNEL_OK")
</pallas_src>

<mosaic_0001>
module attributes {stable_mosaic.version = 11 : i64} {
  func.func @_max_pool_kernel_prefetch(%arg0: i32, %arg1: i32, %arg2: memref<1824xi32, #tpu.memory_space<smem>>, %arg3: memref<208x128xf32, #tpu.memory_space<vmem>>, %arg4: memref<152x128xf32, #tpu.memory_space<vmem>>) attributes {dimension_semantics = [#tpu.dimension_semantics<parallel>, #tpu.dimension_semantics<parallel>], iteration_bounds = array<i64: 1, 2>, scalar_prefetch = 1 : i64, scratch_operands = 0 : i64, tpu.core_type = #tpu.core_type<tc>, window_params = [{pipeline_mode = #tpu.pipeline_mode<synchronous>, transform_indices = @transform_0, window_bounds = array<i64: 208, 128>}, {transform_indices = @transform_1, window_bounds = array<i64: 152, 128>}]} {
    %c912_i32 = arith.constant 912 : i32
    %0 = arith.muli %arg1, %c912_i32 : i32
    %c0_i32 = arith.constant 0 : i32
    %c19_i32 = arith.constant 19 : i32
    %1 = arith.addi %c0_i32, %c19_i32 : i32
    %c1_i32 = arith.constant 1 : i32
    scf.for %arg5 = %c0_i32 to %1 step %c1_i32  : i32 {
      %c8_i32 = arith.constant 8 : i32
      %2 = arith.muli %arg5, %c8_i32 : i32
      %c0_i32_1 = arith.constant 0 : i32
      %3 = arith.addi %2, %c0_i32_1 : i32
      %c6_i32 = arith.constant 6 : i32
      %4 = arith.muli %3, %c6_i32 : i32
      %c0_i32_2 = arith.constant 0 : i32
      %5 = arith.addi %4, %c0_i32_2 : i32
      %6 = arith.addi %0, %5 : i32
      %7 = arith.index_cast %6 : i32 to index
      %8 = memref.load %arg2[%7] : memref<1824xi32, #tpu.memory_space<smem>>
      %9 = arith.index_cast %8 : i32 to index
      %c0 = arith.constant 0 : index
      %10 = vector.load %arg3[%9, %c0] : memref<208x128xf32, #tpu.memory_space<vmem>>, vector<1x128xf32>
      %c1_i32_3 = arith.constant 1 : i32
      %11 = arith.addi %4, %c1_i32_3 : i32
      %12 = arith.addi %0, %11 : i32
      %13 = arith.index_cast %12 : i32 to index
      %14 = memref.load %arg2[%13] : memref<1824xi32, #tpu.memory_space<smem>>
      %15 = arith.index_cast %14 : i32 to index
      %c0_4 = arith.constant 0 : index
      %16 = vector.load %arg3[%15, %c0_4] : memref<208x128xf32, #tpu.memory_space<vmem>>, vector<1x128xf32>
      %c2_i32 = arith.constant 2 : i32
      %17 = arith.addi %4, %c2_i32 : i32
      %18 = arith.addi %0, %17 : i32
      %19 = arith.index_cast %18 : i32 to index
      %20 = memref.load %arg2[%19] : memref<1824xi32, #tpu.memory_space<smem>>
      %21 = arith.index_cast %20 : i32 to index
      %c0_5 = arith.constant 0 : index
      %22 = vector.load %arg3[%21, %c0_5] : memref<208x128xf32, #tpu.memory_space<vmem>>, vector<1x128xf32>
      %c3_i32 = arith.constant 3 : i32
      %23 = arith.addi %4, %c3_i32 : i32
      %24 = arith.addi %0, %23 : i32
      %25 = arith.index_cast %24 : i32 to index
      %26 = memref.load %arg2[%25] : memref<1824xi32, #tpu.memory_space<smem>>
      %27 = arith.index_cast %26 : i32 to index
      %c0_6 = arith.constant 0 : index
      %28 = vector.load %arg3[%27, %c0_6] : memref<208x128xf32, #tpu.memory_space<vmem>>, vector<1x128xf32>
      %c4_i32 = arith.constant 4 : i32
      %29 = arith.addi %4, %c4_i32 : i32
      %30 = arith.addi %0, %29 : i32
      %31 = arith.index_cast %30 : i32 to index
      %32 = memref.load %arg2[%31] : memref<1824xi32, #tpu.memory_space<smem>>
      %33 = arith.index_cast %32 : i32 to index
      %c0_7 = arith.constant 0 : index
      %34 = vector.load %arg3[%33, %c0_7] : memref<208x128xf32, #tpu.memory_space<vmem>>, vector<1x128xf32>
      %c5_i32 = arith.constant 5 : i32
      %35 = arith.addi %4, %c5_i32 : i32
      %36 = arith.addi %0, %35 : i32
      %37 = arith.index_cast %36 : i32 to index
      %38 = memref.load %arg2[%37] : memref<1824xi32, #tpu.memory_space<smem>>
      %39 = arith.index_cast %38 : i32 to index
      %c0_8 = arith.constant 0 : index
      %40 = vector.load %arg3[%39, %c0_8] : memref<208x128xf32, #tpu.memory_space<vmem>>, vector<1x128xf32>
      %41 = arith.maximumf %10, %16 : vector<1x128xf32>
      %42 = arith.maximumf %22, %28 : vector<1x128xf32>
      %43 = arith.maximumf %34, %40 : vector<1x128xf32>
      %44 = arith.maximumf %41, %42 : vector<1x128xf32>
      %45 = arith.maximumf %44, %43 : vector<1x128xf32>
      %c8_i32_9 = arith.constant 8 : i32
      %46 = arith.muli %arg5, %c8_i32_9 : i32
      %c1_i32_10 = arith.constant 1 : i32
      %47 = arith.addi %46, %c1_i32_10 : i32
      %c6_i32_11 = arith.constant 6 : i32
      %48 = arith.muli %47, %c6_i32_11 : i32
      %c0_i32_12 = arith.constant 0 : i32
      %49 = arith.addi %48, %c0_i32_12 : i32
      %50 = arith.addi %0, %49 : i32
      %51 = arith.index_cast %50 : i32 to index
      %52 = memref.load %arg2[%51] : memref<1824xi32, #tpu.memory_space<smem>>
      %53 = arith.index_cast %52 : i32 to index
      %c0_13 = arith.constant 0 : index
      %54 = vector.load %arg3[%53, %c0_13] : memref<208x128xf32, #tpu.memory_space<vmem>>, vector<1x128xf32>
      %c1_i32_14 = arith.constant 1 : i32
      %55 = arith.addi %48, %c1_i32_14 : i32
      %56 = arith.addi %0, %55 : i32
      %57 = arith.index_cast %56 : i32 to index
      %58 = memref.load %arg2[%57] : memref<1824xi32, #tpu.memory_space<smem>>
      %59 = arith.index_cast %58 : i32 to index
      %c0_15 = arith.constant 0 : index
      %60 = vector.load %arg3[%59, %c0_15] : memref<208x128xf32, #tpu.memory_space<vmem>>, vector<1x128xf32>
      %c2_i32_16 = arith.constant 2 : i32
      %61 = arith.addi %48, %c2_i32_16 : i32
      %62 = arith.addi %0, %61 : i32
      %63 = arith.index_cast %62 : i32 to index
      %64 = memref.load %arg2[%63] : memref<1824xi32, #tpu.memory_space<smem>>
      %65 = arith.index_cast %64 : i32 to index
      %c0_17 = arith.constant 0 : index
      %66 = vector.load %arg3[%65, %c0_17] : memref<208x128xf32, #tpu.memory_space<vmem>>, vector<1x128xf32>
      %c3_i32_18 = arith.constant 3 : i32
      %67 = arith.addi %48, %c3_i32_18 : i32
      %68 = arith.addi %0, %67 : i32
      %69 = arith.index_cast %68 : i32 to index
      %70 = memref.load %arg2[%69] : memref<1824xi32, #tpu.memory_space<smem>>
      %71 = arith.index_cast %70 : i32 to index
      %c0_19 = arith.constant 0 : index
      %72 = vector.load %arg3[%71, %c0_19] : memref<208x128xf32, #tpu.memory_space<vmem>>, vector<1x128xf32>
      %c4_i32_20 = arith.constant 4 : i32
      %73 = arith.addi %48, %c4_i32_20 : i32
      %74 = arith.addi %0, %73 : i32
      %75 = arith.index_cast %74 : i32 to index
      %76 = memref.load %arg2[%75] : memref<1824xi32, #tpu.memory_space<smem>>
      %77 = arith.index_cast %76 : i32 to index
      %c0_21 = arith.constant 0 : index
      %78 = vector.load %arg3[%77, %c0_21] : memref<208x128xf32, #tpu.memory_space<vmem>>, vector<1x128xf32>
      %c5_i32_22 = arith.constant 5 : i32
      %79 = arith.addi %48, %c5_i32_22 : i32
      %80 = arith.addi %0, %79 : i32
      %81 = arith.index_cast %80 : i32 to index
      %82 = memref.load %arg2[%81] : memref<1824xi32, #tpu.memory_space<smem>>
      %83 = arith.index_cast %82 : i32 to index
      %c0_23 = arith.constant 0 : index
      %84 = vector.load %arg3[%83, %c0_23] : memref<208x128xf32, #tpu.memory_space<vmem>>, vector<1x128xf32>
      %85 = arith.maximumf %54, %60 : vector<1x128xf32>
      %86 = arith.maximumf %66, %72 : vector<1x128xf32>
      %87 = arith.maximumf %78, %84 : vector<1x128xf32>
      %88 = arith.maximumf %85, %86 : vector<1x128xf32>
      %89 = arith.maximumf %88, %87 : vector<1x128xf32>
      %c8_i32_24 = arith.constant 8 : i32
      %90 = arith.muli %arg5, %c8_i32_24 : i32
      %c2_i32_25 = arith.constant 2 : i32
      %91 = arith.addi %90, %c2_i32_25 : i32
      %c6_i32_26 = arith.constant 6 : i32
      %92 = arith.muli %91, %c6_i32_26 : i32
      %c0_i32_27 = arith.constant 0 : i32
      %93 = arith.addi %92, %c0_i32_27 : i32
      %94 = arith.addi %0, %93 : i32
      %95 = arith.index_cast %94 : i32 to index
      %96 = memref.load %arg2[%95] : memref<1824xi32, #tpu.memory_space<smem>>
      %97 = arith.index_cast %96 : i32 to index
      %c0_28 = arith.constant 0 : index
      %98 = vector.load %arg3[%97, %c0_28] : memref<208x128xf32, #tpu.memory_space<vmem>>, vector<1x128xf32>
      %c1_i32_29 = arith.constant 1 : i32
      %99 = arith.addi %92, %c1_i32_29 : i32
      %100 = arith.addi %0, %99 : i32
      %101 = arith.index_cast %100 : i32 to index
      %102 = memref.load %arg2[%101] : memref<1824xi32, #tpu.memory_space<smem>>
      %103 = arith.index_cast %102 : i32 to index
      %c0_30 = arith.constant 0 : index
      %104 = vector.load %arg3[%103, %c0_30] : memref<208x128xf32, #tpu.memory_space<vmem>>, vector<1x128xf32>
      %c2_i32_31 = arith.constant 2 : i32
      %105 = arith.addi %92, %c2_i32_31 : i32
      %106 = arith.addi %0, %105 : i32
      %107 = arith.index_cast %106 : i32 to index
      %108 = memref.load %arg2[%107] : memref<1824xi32, #tpu.memory_space<smem>>
      %109 = arith.index_cast %108 : i32 to index
      %c0_32 = arith.constant 0 : index
      %110 = vector.load %arg3[%109, %c0_32] : memref<208x128xf32, #tpu.memory_space<vmem>>, vector<1x128xf32>
      %c3_i32_33 = arith.constant 3 : i32
      %111 = arith.addi %92, %c3_i32_33 : i32
      %112 = arith.addi %0, %111 : i32
      %113 = arith.index_cast %112 : i32 to index
      %114 = memref.load %arg2[%113] : memref<1824xi32, #tpu.memory_space<smem>>
      %115 = arith.index_cast %114 : i32 to index
      %c0_34 = arith.constant 0 : index
      %116 = vector.load %arg3[%115, %c0_34] : memref<208x128xf32, #tpu.memory_space<vmem>>, vector<1x128xf32>
      %c4_i32_35 = arith.constant 4 : i32
      %117 = arith.addi %92, %c4_i32_35 : i32
      %118 = arith.addi %0, %117 : i32
      %119 = arith.index_cast %118 : i32 to index
      %120 = memref.load %arg2[%119] : memref<1824xi32, #tpu.memory_space<smem>>
      %121 = arith.index_cast %120 : i32 to index
      %c0_36 = arith.constant 0 : index
      %122 = vector.load %arg3[%121, %c0_36] : memref<208x128xf32, #tpu.memory_space<vmem>>, vector<1x128xf32>
      %c5_i32_37 = arith.constant 5 : i32
      %123 = arith.addi %92, %c5_i32_37 : i32
      %124 = arith.addi %0, %123 : i32
      %125 = arith.index_cast %124 : i32 to index
      %126 = memref.load %arg2[%125] : memref<1824xi32, #tpu.memory_space<smem>>
      %127 = arith.index_cast %126 : i32 to index
      %c0_38 = arith.constant 0 : index
      %128 = vector.load %arg3[%127, %c0_38] : memref<208x128xf32, #tpu.memory_space<vmem>>, vector<1x128xf32>
      %129 = arith.maximumf %98, %104 : vector<1x128xf32>
      %130 = arith.maximumf %110, %116 : vector<1x128xf32>
      %131 = arith.maximumf %122, %128 : vector<1x128xf32>
      %132 = arith.maximumf %129, %130 : vector<1x128xf32>
      %133 = arith.maximumf %132, %131 : vector<1x128xf32>
      %c8_i32_39 = arith.constant 8 : i32
      %134 = arith.muli %arg5, %c8_i32_39 : i32
      %c3_i32_40 = arith.constant 3 : i32
      %135 = arith.addi %134, %c3_i32_40 : i32
      %c6_i32_41 = arith.constant 6 : i32
      %136 = arith.muli %135, %c6_i32_41 : i32
      %c0_i32_42 = arith.constant 0 : i32
      %137 = arith.addi %136, %c0_i32_42 : i32
      %138 = arith.addi %0, %137 : i32
      %139 = arith.index_cast %138 : i32 to index
      %140 = memref.load %arg2[%139] : memref<1824xi32, #tpu.memory_space<smem>>
      %141 = arith.index_cast %140 : i32 to index
      %c0_43 = arith.constant 0 : index
      %142 = vector.load %arg3[%141, %c0_43] : memref<208x128xf32, #tpu.memory_space<vmem>>, vector<1x128xf32>
      %c1_i32_44 = arith.constant 1 : i32
      %143 = arith.addi %136, %c1_i32_44 : i32
      %144 = arith.addi %0, %143 : i32
      %145 = arith.index_cast %144 : i32 to index
      %146 = memref.load %arg2[%145] : memref<1824xi32, #tpu.memory_space<smem>>
      %147 = arith.index_cast %146 : i32 to index
      %c0_45 = arith.constant 0 : index
      %148 = vector.load %arg3[%147, %c0_45] : memref<208x128xf32, #tpu.memory_space<vmem>>, vector<1x128xf32>
      %c2_i32_46 = arith.constant 2 : i32
      %149 = arith.addi %136, %c2_i32_46 : i32
      %150 = arith.addi %0, %149 : i32
      %151 = arith.index_cast %150 : i32 to index
      %152 = memref.load %arg2[%151] : memref<1824xi32, #tpu.memory_space<smem>>
      %153 = arith.index_cast %152 : i32 to index
      %c0_47 = arith.constant 0 : index
      %154 = vector.load %arg3[%153, %c0_47] : memref<208x128xf32, #tpu.memory_space<vmem>>, vector<1x128xf32>
      %c3_i32_48 = arith.constant 3 : i32
      %155 = arith.addi %136, %c3_i32_48 : i32
      %156 = arith.addi %0, %155 : i32
      %157 = arith.index_cast %156 : i32 to index
      %158 = memref.load %arg2[%157] : memref<1824xi32, #tpu.memory_space<smem>>
      %159 = arith.index_cast %158 : i32 to index
      %c0_49 = arith.constant 0 : index
      %160 = vector.load %arg3[%159, %c0_49] : memref<208x128xf32, #tpu.memory_space<vmem>>, vector<1x128xf32>
      %c4_i32_50 = arith.constant 4 : i32
      %161 = arith.addi %136, %c4_i32_50 : i32
      %162 = arith.addi %0, %161 : i32
      %163 = arith.index_cast %162 : i32 to index
      %164 = memref.load %arg2[%163] : memref<1824xi32, #tpu.memory_space<smem>>
      %165 = arith.index_cast %164 : i32 to index
      %c0_51 = arith.constant 0 : index
      %166 = vector.load %arg3[%165, %c0_51] : memref<208x128xf32, #tpu.memory_space<vmem>>, vector<1x128xf32>
      %c5_i32_52 = arith.constant 5 : i32
      %167 = arith.addi %136, %c5_i32_52 : i32
      %168 = arith.addi %0, %167 : i32
      %169 = arith.index_cast %168 : i32 to index
      %170 = memref.load %arg2[%169] : memref<1824xi32, #tpu.memory_space<smem>>
      %171 = arith.index_cast %170 : i32 to index
      %c0_53 = arith.constant 0 : index
      %172 = vector.load %arg3[%171, %c0_53] : memref<208x128xf32, #tpu.memory_space<vmem>>, vector<1x128xf32>
      %173 = arith.maximumf %142, %148 : vector<1x128xf32>
      %174 = arith.maximumf %154, %160 : vector<1x128xf32>
      %175 = arith.maximumf %166, %172 : vector<1x128xf32>
      %176 = arith.maximumf %173, %174 : vector<1x128xf32>
      %177 = arith.maximumf %176, %175 : vector<1x128xf32>
      %c8_i32_54 = arith.constant 8 : i32
      %178 = arith.muli %arg5, %c8_i32_54 : i32
      %c4_i32_55 = arith.constant 4 : i32
      %179 = arith.addi %178, %c4_i32_55 : i32
      %c6_i32_56 = arith.constant 6 : i32
      %180 = arith.muli %179, %c6_i32_56 : i32
      %c0_i32_57 = arith.constant 0 : i32
      %181 = arith.addi %180, %c0_i32_57 : i32
      %182 = arith.addi %0, %181 : i32
      %183 = arith.index_cast %182 : i32 to index
      %184 = memref.load %arg2[%183] : memref<1824xi32, #tpu.memory_space<smem>>
      %185 = arith.index_cast %184 : i32 to index
      %c0_58 = arith.constant 0 : index
      %186 = vector.load %arg3[%185, %c0_58] : memref<208x128xf32, #tpu.memory_space<vmem>>, vector<1x128xf32>
      %c1_i32_59 = arith.constant 1 : i32
      %187 = arith.addi %180, %c1_i32_59 : i32
      %188 = arith.addi %0, %187 : i32
      %189 = arith.index_cast %188 : i32 to index
      %190 = memref.load %arg2[%189] : memref<1824xi32, #tpu.memory_space<smem>>
      %191 = arith.index_cast %190 : i32 to index
      %c0_60 = arith.constant 0 : index
      %192 = vector.load %arg3[%191, %c0_60] : memref<208x128xf32, #tpu.memory_space<vmem>>, vector<1x128xf32>
      %c2_i32_61 = arith.constant 2 : i32
      %193 = arith.addi %180, %c2_i32_61 : i32
      %194 = arith.addi %0, %193 : i32
      %195 = arith.index_cast %194 : i32 to index
      %196 = memref.load %arg2[%195] : memref<1824xi32, #tpu.memory_space<smem>>
      %197 = arith.index_cast %196 : i32 to index
      %c0_62 = arith.constant 0 : index
      %198 = vector.load %arg3[%197, %c0_62] : memref<208x128xf32, #tpu.memory_space<vmem>>, vector<1x128xf32>
      %c3_i32_63 = arith.constant 3 : i32
      %199 = arith.addi %180, %c3_i32_63 : i32
      %200 = arith.addi %0, %199 : i32
      %201 = arith.index_cast %200 : i32 to index
      %202 = memref.load %arg2[%201] : memref<1824xi32, #tpu.memory_space<smem>>
      %203 = arith.index_cast %202 : i32 to index
      %c0_64 = arith.constant 0 : index
      %204 = vector.load %arg3[%203, %c0_64] : memref<208x128xf32, #tpu.memory_space<vmem>>, vector<1x128xf32>
      %c4_i32_65 = arith.constant 4 : i32
      %205 = arith.addi %180, %c4_i32_65 : i32
      %206 = arith.addi %0, %205 : i32
      %207 = arith.index_cast %206 : i32 to index
      %208 = memref.load %arg2[%207] : memref<1824xi32, #tpu.memory_space<smem>>
      %209 = arith.index_cast %208 : i32 to index
      %c0_66 = arith.constant 0 : index
      %210 = vector.load %arg3[%209, %c0_66] : memref<208x128xf32, #tpu.memory_space<vmem>>, vector<1x128xf32>
      %c5_i32_67 = arith.constant 5 : i32
      %211 = arith.addi %180, %c5_i32_67 : i32
      %212 = arith.addi %0, %211 : i32
      %213 = arith.index_cast %212 : i32 to index
      %214 = memref.load %arg2[%213] : memref<1824xi32, #tpu.memory_space<smem>>
      %215 = arith.index_cast %214 : i32 to index
      %c0_68 = arith.constant 0 : index
      %216 = vector.load %arg3[%215, %c0_68] : memref<208x128xf32, #tpu.memory_space<vmem>>, vector<1x128xf32>
      %217 = arith.maximumf %186, %192 : vector<1x128xf32>
      %218 = arith.maximumf %198, %204 : vector<1x128xf32>
      %219 = arith.maximumf %210, %216 : vector<1x128xf32>
      %220 = arith.maximumf %217, %218 : vector<1x128xf32>
      %221 = arith.maximumf %220, %219 : vector<1x128xf32>
      %c8_i32_69 = arith.constant 8 : i32
      %222 = arith.muli %arg5, %c8_i32_69 : i32
      %c5_i32_70 = arith.constant 5 : i32
      %223 = arith.addi %222, %c5_i32_70 : i32
      %c6_i32_71 = arith.constant 6 : i32
      %224 = arith.muli %223, %c6_i32_71 : i32
      %c0_i32_72 = arith.constant 0 : i32
      %225 = arith.addi %224, %c0_i32_72 : i32
      %226 = arith.addi %0, %225 : i32
      %227 = arith.index_cast %226 : i32 to index
      %228 = memref.load %arg2[%227] : memref<1824xi32, #tpu.memory_space<smem>>
      %229 = arith.index_cast %228 : i32 to index
      %c0_73 = arith.constant 0 : index
      %230 = vector.load %arg3[%229, %c0_73] : memref<208x128xf32, #tpu.memory_space<vmem>>, vector<1x128xf32>
      %c1_i32_74 = arith.constant 1 : i32
      %231 = arith.addi %224, %c1_i32_74 : i32
      %232 = arith.addi %0, %231 : i32
      %233 = arith.index_cast %232 : i32 to index
      %234 = memref.load %arg2[%233] : memref<1824xi32, #tpu.memory_space<smem>>
      %235 = arith.index_cast %234 : i32 to index
      %c0_75 = arith.constant 0 : index
      %236 = vector.load %arg3[%235, %c0_75] : memref<208x128xf32, #tpu.memory_space<vmem>>, vector<1x128xf32>
      %c2_i32_76 = arith.constant 2 : i32
      %237 = arith.addi %224, %c2_i32_76 : i32
      %238 = arith.addi %0, %237 : i32
      %239 = arith.index_cast %238 : i32 to index
      %240 = memref.load %arg2[%239] : memref<1824xi32, #tpu.memory_space<smem>>
      %241 = arith.index_cast %240 : i32 to index
      %c0_77 = arith.constant 0 : index
      %242 = vector.load %arg3[%241, %c0_77] : memref<208x128xf32, #tpu.memory_space<vmem>>, vector<1x128xf32>
      %c3_i32_78 = arith.constant 3 : i32
      %243 = arith.addi %224, %c3_i32_78 : i32
      %244 = arith.addi %0, %243 : i32
      %245 = arith.index_cast %244 : i32 to index
      %246 = memref.load %arg2[%245] : memref<1824xi32, #tpu.memory_space<smem>>
      %247 = arith.index_cast %246 : i32 to index
      %c0_79 = arith.constant 0 : index
      %248 = vector.load %arg3[%247, %c0_79] : memref<208x128xf32, #tpu.memory_space<vmem>>, vector<1x128xf32>
      %c4_i32_80 = arith.constant 4 : i32
      %249 = arith.addi %224, %c4_i32_80 : i32
      %250 = arith.addi %0, %249 : i32
      %251 = arith.index_cast %250 : i32 to index
      %252 = memref.load %arg2[%251] : memref<1824xi32, #tpu.memory_space<smem>>
      %253 = arith.index_cast %252 : i32 to index
      %c0_81 = arith.constant 0 : index
      %254 = vector.load %arg3[%253, %c0_81] : memref<208x128xf32, #tpu.memory_space<vmem>>, vector<1x128xf32>
      %c5_i32_82 = arith.constant 5 : i32
      %255 = arith.addi %224, %c5_i32_82 : i32
      %256 = arith.addi %0, %255 : i32
      %257 = arith.index_cast %256 : i32 to index
      %258 = memref.load %arg2[%257] : memref<1824xi32, #tpu.memory_space<smem>>
      %259 = arith.index_cast %258 : i32 to index
      %c0_83 = arith.constant 0 : index
      %260 = vector.load %arg3[%259, %c0_83] : memref<208x128xf32, #tpu.memory_space<vmem>>, vector<1x128xf32>
      %261 = arith.maximumf %230, %236 : vector<1x128xf32>
      %262 = arith.maximumf %242, %248 : vector<1x128xf32>
      %263 = arith.maximumf %254, %260 : vector<1x128xf32>
      %264 = arith.maximumf %261, %262 : vector<1x128xf32>
      %265 = arith.maximumf %264, %263 : vector<1x128xf32>
      %c8_i32_84 = arith.constant 8 : i32
      %266 = arith.muli %arg5, %c8_i32_84 : i32
      %c6_i32_85 = arith.constant 6 : i32
      %267 = arith.addi %266, %c6_i32_85 : i32
      %c6_i32_86 = arith.constant 6 : i32
      %268 = arith.muli %267, %c6_i32_86 : i32
      %c0_i32_87 = arith.constant 0 : i32
      %269 = arith.addi %268, %c0_i32_87 : i32
      %270 = arith.addi %0, %269 : i32
      %271 = arith.index_cast %270 : i32 to index
      %272 = memref.load %arg2[%271] : memref<1824xi32, #tpu.memory_space<smem>>
      %273 = arith.index_cast %272 : i32 to index
      %c0_88 = arith.constant 0 : index
      %274 = vector.load %arg3[%273, %c0_88] : memref<208x128xf32, #tpu.memory_space<vmem>>, vector<1x128xf32>
      %c1_i32_89 = arith.constant 1 : i32
      %275 = arith.addi %268, %c1_i32_89 : i32
      %276 = arith.addi %0, %275 : i32
      %277 = arith.index_cast %276 : i32 to index
      %278 = memref.load %arg2[%277] : memref<1824xi32, #tpu.memory_space<smem>>
      %279 = arith.index_cast %278 : i32 to index
      %c0_90 = arith.constant 0 : index
      %280 = vector.load %arg3[%279, %c0_90] : memref<208x128xf32, #tpu.memory_space<vmem>>, vector<1x128xf32>
      %c2_i32_91 = arith.constant 2 : i32
      %281 = arith.addi %268, %c2_i32_91 : i32
      %282 = arith.addi %0, %281 : i32
      %283 = arith.index_cast %282 : i32 to index
      %284 = memref.load %arg2[%283] : memref<1824xi32, #tpu.memory_space<smem>>
      %285 = arith.index_cast %284 : i32 to index
      %c0_92 = arith.constant 0 : index
      %286 = vector.load %arg3[%285, %c0_92] : memref<208x128xf32, #tpu.memory_space<vmem>>, vector<1x128xf32>
      %c3_i32_93 = arith.constant 3 : i32
      %287 = arith.addi %268, %c3_i32_93 : i32
      %288 = arith.addi %0, %287 : i32
      %289 = arith.index_cast %288 : i32 to index
      %290 = memref.load %arg2[%289] : memref<1824xi32, #tpu.memory_space<smem>>
      %291 = arith.index_cast %290 : i32 to index
      %c0_94 = arith.constant 0 : index
      %292 = vector.load %arg3[%291, %c0_94] : memref<208x128xf32, #tpu.memory_space<vmem>>, vector<1x128xf32>
      %c4_i32_95 = arith.constant 4 : i32
      %293 = arith.addi %268, %c4_i32_95 : i32
      %294 = arith.addi %0, %293 : i32
      %295 = arith.index_cast %294 : i32 to index
      %296 = memref.load %arg2[%295] : memref<1824xi32, #tpu.memory_space<smem>>
      %297 = arith.index_cast %296 : i32 to index
      %c0_96 = arith.constant 0 : index
      %298 = vector.load %arg3[%297, %c0_96] : memref<208x128xf32, #tpu.memory_space<vmem>>, vector<1x128xf32>
      %c5_i32_97 = arith.constant 5 : i32
      %299 = arith.addi %268, %c5_i32_97 : i32
      %300 = arith.addi %0, %299 : i32
      %301 = arith.index_cast %300 : i32 to index
      %302 = memref.load %arg2[%301] : memref<1824xi32, #tpu.memory_space<smem>>
      %303 = arith.index_cast %302 : i32 to index
      %c0_98 = arith.constant 0 : index
      %304 = vector.load %arg3[%303, %c0_98] : memref<208x128xf32, #tpu.memory_space<vmem>>, vector<1x128xf32>
      %305 = arith.maximumf %274, %280 : vector<1x128xf32>
      %306 = arith.maximumf %286, %292 : vector<1x128xf32>
      %307 = arith.maximumf %298, %304 : vector<1x128xf32>
      %308 = arith.maximumf %305, %306 : vector<1x128xf32>
      %309 = arith.maximumf %308, %307 : vector<1x128xf32>
      %c8_i32_99 = arith.constant 8 : i32
      %310 = arith.muli %arg5, %c8_i32_99 : i32
      %c7_i32 = arith.constant 7 : i32
      %311 = arith.addi %310, %c7_i32 : i32
      %c6_i32_100 = arith.constant 6 : i32
      %312 = arith.muli %311, %c6_i32_100 : i32
      %c0_i32_101 = arith.constant 0 : i32
      %313 = arith.addi %312, %c0_i32_101 : i32
      %314 = arith.addi %0, %313 : i32
      %315 = arith.index_cast %314 : i32 to index
      %316 = memref.load %arg2[%315] : memref<1824xi32, #tpu.memory_space<smem>>
      %317 = arith.index_cast %316 : i32 to index
      %c0_102 = arith.constant 0 : index
      %318 = vector.load %arg3[%317, %c0_102] : memref<208x128xf32, #tpu.memory_space<vmem>>, vector<1x128xf32>
      %c1_i32_103 = arith.constant 1 : i32
      %319 = arith.addi %312, %c1_i32_103 : i32
      %320 = arith.addi %0, %319 : i32
      %321 = arith.index_cast %320 : i32 to index
      %322 = memref.load %arg2[%321] : memref<1824xi32, #tpu.memory_space<smem>>
      %323 = arith.index_cast %322 : i32 to index
      %c0_104 = arith.constant 0 : index
      %324 = vector.load %arg3[%323, %c0_104] : memref<208x128xf32, #tpu.memory_space<vmem>>, vector<1x128xf32>
      %c2_i32_105 = arith.constant 2 : i32
      %325 = arith.addi %312, %c2_i32_105 : i32
      %326 = arith.addi %0, %325 : i32
      %327 = arith.index_cast %326 : i32 to index
      %328 = memref.load %arg2[%327] : memref<1824xi32, #tpu.memory_space<smem>>
      %329 = arith.index_cast %328 : i32 to index
      %c0_106 = arith.constant 0 : index
      %330 = vector.load %arg3[%329, %c0_106] : memref<208x128xf32, #tpu.memory_space<vmem>>, vector<1x128xf32>
      %c3_i32_107 = arith.constant 3 : i32
      %331 = arith.addi %312, %c3_i32_107 : i32
      %332 = arith.addi %0, %331 : i32
      %333 = arith.index_cast %332 : i32 to index
      %334 = memref.load %arg2[%333] : memref<1824xi32, #tpu.memory_space<smem>>
      %335 = arith.index_cast %334 : i32 to index
      %c0_108 = arith.constant 0 : index
      %336 = vector.load %arg3[%335, %c0_108] : memref<208x128xf32, #tpu.memory_space<vmem>>, vector<1x128xf32>
      %c4_i32_109 = arith.constant 4 : i32
      %337 = arith.addi %312, %c4_i32_109 : i32
      %338 = arith.addi %0, %337 : i32
      %339 = arith.index_cast %338 : i32 to index
      %340 = memref.load %arg2[%339] : memref<1824xi32, #tpu.memory_space<smem>>
      %341 = arith.index_cast %340 : i32 to index
      %c0_110 = arith.constant 0 : index
      %342 = vector.load %arg3[%341, %c0_110] : memref<208x128xf32, #tpu.memory_space<vmem>>, vector<1x128xf32>
      %c5_i32_111 = arith.constant 5 : i32
      %343 = arith.addi %312, %c5_i32_111 : i32
      %344 = arith.addi %0, %343 : i32
      %345 = arith.index_cast %344 : i32 to index
      %346 = memref.load %arg2[%345] : memref<1824xi32, #tpu.memory_space<smem>>
      %347 = arith.index_cast %346 : i32 to index
      %c0_112 = arith.constant 0 : index
      %348 = vector.load %arg3[%347, %c0_112] : memref<208x128xf32, #tpu.memory_space<vmem>>, vector<1x128xf32>
      %349 = arith.maximumf %318, %324 : vector<1x128xf32>
      %350 = arith.maximumf %330, %336 : vector<1x128xf32>
      %351 = arith.maximumf %342, %348 : vector<1x128xf32>
      %352 = arith.maximumf %349, %350 : vector<1x128xf32>
      %353 = arith.maximumf %352, %351 : vector<1x128xf32>
      %354 = tpu.concatenate %45, %89, %133, %177, %221, %265, %309, %353 in 0 : vector<1x128xf32>, vector<1x128xf32>, vector<1x128xf32>, vector<1x128xf32>, vector<1x128xf32>, vector<1x128xf32>, vector<1x128xf32>, vector<1x128xf32> -> vector<8x128xf32>
      %c8_i32_113 = arith.constant 8 : i32
      %355 = arith.muli %arg5, %c8_i32_113 : i32
      %356 = tpu.assume_multiple %355, 8 : i32
      %357 = arith.index_cast %356 : i32 to index
      %c0_114 = arith.constant 0 : index
      %358 = vector.load %arg4[%357, %c0_114] : memref<152x128xf32, #tpu.memory_space<vmem>>, vector<8x128xf32>
      tpu.vector_store %arg4[%357, %c0_114], %354 {strides = array<i32>} : memref<152x128xf32, #tpu.memory_space<vmem>>, vector<8x128xf32>,
    }
    %c19_i32_0 = arith.constant 19 : i32
    return
  }
  func.func @transform_0(%arg0: i32, %arg1: i32, %arg2: memref<1824xi32, #tpu.memory_space<smem>>) -> (i32, i32) {
    %c0_i32 = arith.constant 0 : i32
    %c0_i32_0 = arith.constant 0 : i32
    return %c0_i32, %arg0 : i32, i32
  }
  func.func @transform_1(%arg0: i32, %arg1: i32, %arg2: memref<1824xi32, #tpu.memory_space<smem>>) -> (i32, i32) {
    %c0_i32 = arith.constant 0 : i32
    return %arg1, %arg0 : i32, i32
  }
}

module attributes {stable_mosaic.version = 11 : i64} {
  func.func @_max_pool_kernel_prefetch(%arg0: i32, %arg1: i32, %arg2: memref<1824xi32, #tpu.memory_space<smem>>, %arg3: memref<208x128xf32, #tpu.memory_space<vmem>>, %arg4: memref<152x128xf32, #tpu.memory_space<vmem>>) attributes {dimension_semantics = [#tpu.dimension_semantics<parallel>, #tpu.dimension_semantics<parallel>], iteration_bounds = array<i64: 1, 2>, scalar_prefetch = 1 : i64, scratch_operands = 0 : i64, tpu.core_type = #tpu.core_type<tc>, window_params = [{transform_indices = @transform_0, window_bounds = array<i64: 208, 128>}, {transform_indices = @transform_1, window_bounds = array<i64: 152, 128>}]} {
    %c912_i32 = arith.constant 912 : i32
    %0 = arith.muli %arg1, %c912_i32 : i32
    %c0_i32 = arith.constant 0 : i32
    %c19_i32 = arith.constant 19 : i32
    %1 = arith.addi %c0_i32, %c19_i32 : i32
    %c1_i32 = arith.constant 1 : i32
    scf.for %arg5 = %c0_i32 to %1 step %c1_i32  : i32 {
      %c8_i32 = arith.constant 8 : i32
      %2 = arith.muli %arg5, %c8_i32 : i32
      %c0_i32_1 = arith.constant 0 : i32
      %3 = arith.addi %2, %c0_i32_1 : i32
      %c6_i32 = arith.constant 6 : i32
      %4 = arith.muli %3, %c6_i32 : i32
      %c0_i32_2 = arith.constant 0 : i32
      %5 = arith.addi %4, %c0_i32_2 : i32
      %6 = arith.addi %0, %5 : i32
      %7 = arith.index_cast %6 : i32 to index
      %8 = memref.load %arg2[%7] : memref<1824xi32, #tpu.memory_space<smem>>
      %9 = arith.index_cast %8 : i32 to index
      %c0 = arith.constant 0 : index
      %10 = vector.load %arg3[%9, %c0] : memref<208x128xf32, #tpu.memory_space<vmem>>, vector<1x128xf32>
      %c1_i32_3 = arith.constant 1 : i32
      %11 = arith.addi %4, %c1_i32_3 : i32
      %12 = arith.addi %0, %11 : i32
      %13 = arith.index_cast %12 : i32 to index
      %14 = memref.load %arg2[%13] : memref<1824xi32, #tpu.memory_space<smem>>
      %15 = arith.index_cast %14 : i32 to index
      %c0_4 = arith.constant 0 : index
      %16 = vector.load %arg3[%15, %c0_4] : memref<208x128xf32, #tpu.memory_space<vmem>>, vector<1x128xf32>
      %c2_i32 = arith.constant 2 : i32
      %17 = arith.addi %4, %c2_i32 : i32
      %18 = arith.addi %0, %17 : i32
      %19 = arith.index_cast %18 : i32 to index
      %20 = memref.load %arg2[%19] : memref<1824xi32, #tpu.memory_space<smem>>
      %21 = arith.index_cast %20 : i32 to index
      %c0_5 = arith.constant 0 : index
      %22 = vector.load %arg3[%21, %c0_5] : memref<208x128xf32, #tpu.memory_space<vmem>>, vector<1x128xf32>
      %c3_i32 = arith.constant 3 : i32
      %23 = arith.addi %4, %c3_i32 : i32
      %24 = arith.addi %0, %23 : i32
      %25 = arith.index_cast %24 : i32 to index
      %26 = memref.load %arg2[%25] : memref<1824xi32, #tpu.memory_space<smem>>
      %27 = arith.index_cast %26 : i32 to index
      %c0_6 = arith.constant 0 : index
      %28 = vector.load %arg3[%27, %c0_6] : memref<208x128xf32, #tpu.memory_space<vmem>>, vector<1x128xf32>
      %c4_i32 = arith.constant 4 : i32
      %29 = arith.addi %4, %c4_i32 : i32
      %30 = arith.addi %0, %29 : i32
      %31 = arith.index_cast %30 : i32 to index
      %32 = memref.load %arg2[%31] : memref<1824xi32, #tpu.memory_space<smem>>
      %33 = arith.index_cast %32 : i32 to index
      %c0_7 = arith.constant 0 : index
      %34 = vector.load %arg3[%33, %c0_7] : memref<208x128xf32, #tpu.memory_space<vmem>>, vector<1x128xf32>
      %c5_i32 = arith.constant 5 : i32
      %35 = arith.addi %4, %c5_i32 : i32
      %36 = arith.addi %0, %35 : i32
      %37 = arith.index_cast %36 : i32 to index
      %38 = memref.load %arg2[%37] : memref<1824xi32, #tpu.memory_space<smem>>
      %39 = arith.index_cast %38 : i32 to index
      %c0_8 = arith.constant 0 : index
      %40 = vector.load %arg3[%39, %c0_8] : memref<208x128xf32, #tpu.memory_space<vmem>>, vector<1x128xf32>
      %41 = arith.maximumf %10, %16 : vector<1x128xf32>
      %42 = arith.maximumf %22, %28 : vector<1x128xf32>
      %43 = arith.maximumf %34, %40 : vector<1x128xf32>
      %44 = arith.maximumf %41, %42 : vector<1x128xf32>
      %45 = arith.maximumf %44, %43 : vector<1x128xf32>
      %c8_i32_9 = arith.constant 8 : i32
      %46 = arith.muli %arg5, %c8_i32_9 : i32
      %c1_i32_10 = arith.constant 1 : i32
      %47 = arith.addi %46, %c1_i32_10 : i32
      %c6_i32_11 = arith.constant 6 : i32
      %48 = arith.muli %47, %c6_i32_11 : i32
      %c0_i32_12 = arith.constant 0 : i32
      %49 = arith.addi %48, %c0_i32_12 : i32
      %50 = arith.addi %0, %49 : i32
      %51 = arith.index_cast %50 : i32 to index
      %52 = memref.load %arg2[%51] : memref<1824xi32, #tpu.memory_space<smem>>
      %53 = arith.index_cast %52 : i32 to index
      %c0_13 = arith.constant 0 : index
      %54 = vector.load %arg3[%53, %c0_13] : memref<208x128xf32, #tpu.memory_space<vmem>>, vector<1x128xf32>
      %c1_i32_14 = arith.constant 1 : i32
      %55 = arith.addi %48, %c1_i32_14 : i32
      %56 = arith.addi %0, %55 : i32
      %57 = arith.index_cast %56 : i32 to index
      %58 = memref.load %arg2[%57] : memref<1824xi32, #tpu.memory_space<smem>>
      %59 = arith.index_cast %58 : i32 to index
      %c0_15 = arith.constant 0 : index
      %60 = vector.load %arg3[%59, %c0_15] : memref<208x128xf32, #tpu.memory_space<vmem>>, vector<1x128xf32>
      %c2_i32_16 = arith.constant 2 : i32
      %61 = arith.addi %48, %c2_i32_16 : i32
      %62 = arith.addi %0, %61 : i32
      %63 = arith.index_cast %62 : i32 to index
      %64 = memref.load %arg2[%63] : memref<1824xi32, #tpu.memory_space<smem>>
      %65 = arith.index_cast %64 : i32 to index
      %c0_17 = arith.constant 0 : index
      %66 = vector.load %arg3[%65, %c0_17] : memref<208x128xf32, #tpu.memory_space<vmem>>, vector<1x128xf32>
      %c3_i32_18 = arith.constant 3 : i32
      %67 = arith.addi %48, %c3_i32_18 : i32
      %68 = arith.addi %0, %67 : i32
      %69 = arith.index_cast %68 : i32 to index
      %70 = memref.load %arg2[%69] : memref<1824xi32, #tpu.memory_space<smem>>
      %71 = arith.index_cast %70 : i32 to index
      %c0_19 = arith.constant 0 : index
      %72 = vector.load %arg3[%71, %c0_19] : memref<208x128xf32, #tpu.memory_space<vmem>>, vector<1x128xf32>
      %c4_i32_20 = arith.constant 4 : i32
      %73 = arith.addi %48, %c4_i32_20 : i32
      %74 = arith.addi %0, %73 : i32
      %75 = arith.index_cast %74 : i32 to index
      %76 = memref.load %arg2[%75] : memref<1824xi32, #tpu.memory_space<smem>>
      %77 = arith.index_cast %76 : i32 to index
      %c0_21 = arith.constant 0 : index
      %78 = vector.load %arg3[%77, %c0_21] : memref<208x128xf32, #tpu.memory_space<vmem>>, vector<1x128xf32>
      %c5_i32_22 = arith.constant 5 : i32
      %79 = arith.addi %48, %c5_i32_22 : i32
      %80 = arith.addi %0, %79 : i32
      %81 = arith.index_cast %80 : i32 to index
      %82 = memref.load %arg2[%81] : memref<1824xi32, #tpu.memory_space<smem>>
      %83 = arith.index_cast %82 : i32 to index
      %c0_23 = arith.constant 0 : index
      %84 = vector.load %arg3[%83, %c0_23] : memref<208x128xf32, #tpu.memory_space<vmem>>, vector<1x128xf32>
      %85 = arith.maximumf %54, %60 : vector<1x128xf32>
      %86 = arith.maximumf %66, %72 : vector<1x128xf32>
      %87 = arith.maximumf %78, %84 : vector<1x128xf32>
      %88 = arith.maximumf %85, %86 : vector<1x128xf32>
      %89 = arith.maximumf %88, %87 : vector<1x128xf32>
      %c8_i32_24 = arith.constant 8 : i32
      %90 = arith.muli %arg5, %c8_i32_24 : i32
      %c2_i32_25 = arith.constant 2 : i32
      %91 = arith.addi %90, %c2_i32_25 : i32
      %c6_i32_26 = arith.constant 6 : i32
      %92 = arith.muli %91, %c6_i32_26 : i32
      %c0_i32_27 = arith.constant 0 : i32
      %93 = arith.addi %92, %c0_i32_27 : i32
      %94 = arith.addi %0, %93 : i32
      %95 = arith.index_cast %94 : i32 to index
      %96 = memref.load %arg2[%95] : memref<1824xi32, #tpu.memory_space<smem>>
      %97 = arith.index_cast %96 : i32 to index
      %c0_28 = arith.constant 0 : index
      %98 = vector.load %arg3[%97, %c0_28] : memref<208x128xf32, #tpu.memory_space<vmem>>, vector<1x128xf32>
      %c1_i32_29 = arith.constant 1 : i32
      %99 = arith.addi %92, %c1_i32_29 : i32
      %100 = arith.addi %0, %99 : i32
      %101 = arith.index_cast %100 : i32 to index
      %102 = memref.load %arg2[%101] : memref<1824xi32, #tpu.memory_space<smem>>
      %103 = arith.index_cast %102 : i32 to index
      %c0_30 = arith.constant 0 : index
      %104 = vector.load %arg3[%103, %c0_30] : memref<208x128xf32, #tpu.memory_space<vmem>>, vector<1x128xf32>
      %c2_i32_31 = arith.constant 2 : i32
      %105 = arith.addi %92, %c2_i32_31 : i32
      %106 = arith.addi %0, %105 : i32
      %107 = arith.index_cast %106 : i32 to index
      %108 = memref.load %arg2[%107] : memref<1824xi32, #tpu.memory_space<smem>>
      %109 = arith.index_cast %108 : i32 to index
      %c0_32 = arith.constant 0 : index
      %110 = vector.load %arg3[%109, %c0_32] : memref<208x128xf32, #tpu.memory_space<vmem>>, vector<1x128xf32>
      %c3_i32_33 = arith.constant 3 : i32
      %111 = arith.addi %92, %c3_i32_33 : i32
      %112 = arith.addi %0, %111 : i32
      %113 = arith.index_cast %112 : i32 to index
      %114 = memref.load %arg2[%113] : memref<1824xi32, #tpu.memory_space<smem>>
      %115 = arith.index_cast %114 : i32 to index
      %c0_34 = arith.constant 0 : index
      %116 = vector.load %arg3[%115, %c0_34] : memref<208x128xf32, #tpu.memory_space<vmem>>, vector<1x128xf32>
      %c4_i32_35 = arith.constant 4 : i32
      %117 = arith.addi %92, %c4_i32_35 : i32
      %118 = arith.addi %0, %117 : i32
      %119 = arith.index_cast %118 : i32 to index
      %120 = memref.load %arg2[%119] : memref<1824xi32, #tpu.memory_space<smem>>
      %121 = arith.index_cast %120 : i32 to index
      %c0_36 = arith.constant 0 : index
      %122 = vector.load %arg3[%121, %c0_36] : memref<208x128xf32, #tpu.memory_space<vmem>>, vector<1x128xf32>
      %c5_i32_37 = arith.constant 5 : i32
      %123 = arith.addi %92, %c5_i32_37 : i32
      %124 = arith.addi %0, %123 : i32
      %125 = arith.index_cast %124 : i32 to index
      %126 = memref.load %arg2[%125] : memref<1824xi32, #tpu.memory_space<smem>>
      %127 = arith.index_cast %126 : i32 to index
      %c0_38 = arith.constant 0 : index
      %128 = vector.load %arg3[%127, %c0_38] : memref<208x128xf32, #tpu.memory_space<vmem>>, vector<1x128xf32>
      %129 = arith.maximumf %98, %104 : vector<1x128xf32>
      %130 = arith.maximumf %110, %116 : vector<1x128xf32>
      %131 = arith.maximumf %122, %128 : vector<1x128xf32>
      %132 = arith.maximumf %129, %130 : vector<1x128xf32>
      %133 = arith.maximumf %132, %131 : vector<1x128xf32>
      %c8_i32_39 = arith.constant 8 : i32
      %134 = arith.muli %arg5, %c8_i32_39 : i32
      %c3_i32_40 = arith.constant 3 : i32
      %135 = arith.addi %134, %c3_i32_40 : i32
      %c6_i32_41 = arith.constant 6 : i32
      %136 = arith.muli %135, %c6_i32_41 : i32
      %c0_i32_42 = arith.constant 0 : i32
      %137 = arith.addi %136, %c0_i32_42 : i32
      %138 = arith.addi %0, %137 : i32
      %139 = arith.index_cast %138 : i32 to index
      %140 = memref.load %arg2[%139] : memref<1824xi32, #tpu.memory_space<smem>>
      %141 = arith.index_cast %140 : i32 to index
      %c0_43 = arith.constant 0 : index
      %142 = vector.load %arg3[%141, %c0_43] : memref<208x128xf32, #tpu.memory_space<vmem>>, vector<1x128xf32>
      %c1_i32_44 = arith.constant 1 : i32
      %143 = arith.addi %136, %c1_i32_44 : i32
      %144 = arith.addi %0, %143 : i32
      %145 = arith.index_cast %144 : i32 to index
      %146 = memref.load %arg2[%145] : memref<1824xi32, #tpu.memory_space<smem>>
      %147 = arith.index_cast %146 : i32 to index
      %c0_45 = arith.constant 0 : index
      %148 = vector.load %arg3[%147, %c0_45] : memref<208x128xf32, #tpu.memory_space<vmem>>, vector<1x128xf32>
      %c2_i32_46 = arith.constant 2 : i32
      %149 = arith.addi %136, %c2_i32_46 : i32
      %150 = arith.addi %0, %149 : i32
      %151 = arith.index_cast %150 : i32 to index
      %152 = memref.load %arg2[%151] : memref<1824xi32, #tpu.memory_space<smem>>
      %153 = arith.index_cast %152 : i32 to index
      %c0_47 = arith.constant 0 : index
      %154 = vector.load %arg3[%153, %c0_47] : memref<208x128xf32, #tpu.memory_space<vmem>>, vector<1x128xf32>
      %c3_i32_48 = arith.constant 3 : i32
      %155 = arith.addi %136, %c3_i32_48 : i32
      %156 = arith.addi %0, %155 : i32
      %157 = arith.index_cast %156 : i32 to index
      %158 = memref.load %arg2[%157] : memref<1824xi32, #tpu.memory_space<smem>>
      %159 = arith.index_cast %158 : i32 to index
      %c0_49 = arith.constant 0 : index
      %160 = vector.load %arg3[%159, %c0_49] : memref<208x128xf32, #tpu.memory_space<vmem>>, vector<1x128xf32>
      %c4_i32_50 = arith.constant 4 : i32
      %161 = arith.addi %136, %c4_i32_50 : i32
      %162 = arith.addi %0, %161 : i32
      %163 = arith.index_cast %162 : i32 to index
      %164 = memref.load %arg2[%163] : memref<1824xi32, #tpu.memory_space<smem>>
      %165 = arith.index_cast %164 : i32 to index
      %c0_51 = arith.constant 0 : index
      %166 = vector.load %arg3[%165, %c0_51] : memref<208x128xf32, #tpu.memory_space<vmem>>, vector<1x128xf32>
      %c5_i32_52 = arith.constant 5 : i32
      %167 = arith.addi %136, %c5_i32_52 : i32
      %168 = arith.addi %0, %167 : i32
      %169 = arith.index_cast %168 : i32 to index
      %170 = memref.load %arg2[%169] : memref<1824xi32, #tpu.memory_space<smem>>
      %171 = arith.index_cast %170 : i32 to index
      %c0_53 = arith.constant 0 : index
      %172 = vector.load %arg3[%171, %c0_53] : memref<208x128xf32, #tpu.memory_space<vmem>>, vector<1x128xf32>
      %173 = arith.maximumf %142, %148 : vector<1x128xf32>
      %174 = arith.maximumf %154, %160 : vector<1x128xf32>
      %175 = arith.maximumf %166, %172 : vector<1x128xf32>
      %176 = arith.maximumf %173, %174 : vector<1x128xf32>
      %177 = arith.maximumf %176, %175 : vector<1x128xf32>
      %c8_i32_54 = arith.constant 8 : i32
      %178 = arith.muli %arg5, %c8_i32_54 : i32
      %c4_i32_55 = arith.constant 4 : i32
      %179 = arith.addi %178, %c4_i32_55 : i32
      %c6_i32_56 = arith.constant 6 : i32
      %180 = arith.muli %179, %c6_i32_56 : i32
      %c0_i32_57 = arith.constant 0 : i32
      %181 = arith.addi %180, %c0_i32_57 : i32
      %182 = arith.addi %0, %181 : i32
      %183 = arith.index_cast %182 : i32 to index
      %184 = memref.load %arg2[%183] : memref<1824xi32, #tpu.memory_space<smem>>
      %185 = arith.index_cast %184 : i32 to index
      %c0_58 = arith.constant 0 : index
      %186 = vector.load %arg3[%185, %c0_58] : memref<208x128xf32, #tpu.memory_space<vmem>>, vector<1x128xf32>
      %c1_i32_59 = arith.constant 1 : i32
      %187 = arith.addi %180, %c1_i32_59 : i32
      %188 = arith.addi %0, %187 : i32
      %189 = arith.index_cast %188 : i32 to index
      %190 = memref.load %arg2[%189] : memref<1824xi32, #tpu.memory_space<smem>>
      %191 = arith.index_cast %190 : i32 to index
      %c0_60 = arith.constant 0 : index
      %192 = vector.load %arg3[%191, %c0_60] : memref<208x128xf32, #tpu.memory_space<vmem>>, vector<1x128xf32>
      %c2_i32_61 = arith.constant 2 : i32
      %193 = arith.addi %180, %c2_i32_61 : i32
      %194 = arith.addi %0, %193 : i32
      %195 = arith.index_cast %194 : i32 to index
      %196 = memref.load %arg2[%195] : memref<1824xi32, #tpu.memory_space<smem>>
      %197 = arith.index_cast %196 : i32 to index
      %c0_62 = arith.constant 0 : index
      %198 = vector.load %arg3[%197, %c0_62] : memref<208x128xf32, #tpu.memory_space<vmem>>, vector<1x128xf32>
      %c3_i32_63 = arith.constant 3 : i32
      %199 = arith.addi %180, %c3_i32_63 : i32
      %200 = arith.addi %0, %199 : i32
      %201 = arith.index_cast %200 : i32 to index
      %202 = memref.load %arg2[%201] : memref<1824xi32, #tpu.memory_space<smem>>
      %203 = arith.index_cast %202 : i32 to index
      %c0_64 = arith.constant 0 : index
      %204 = vector.load %arg3[%203, %c0_64] : memref<208x128xf32, #tpu.memory_space<vmem>>, vector<1x128xf32>
      %c4_i32_65 = arith.constant 4 : i32
      %205 = arith.addi %180, %c4_i32_65 : i32
      %206 = arith.addi %0, %205 : i32
      %207 = arith.index_cast %206 : i32 to index
      %208 = memref.load %arg2[%207] : memref<1824xi32, #tpu.memory_space<smem>>
      %209 = arith.index_cast %208 : i32 to index
      %c0_66 = arith.constant 0 : index
      %210 = vector.load %arg3[%209, %c0_66] : memref<208x128xf32, #tpu.memory_space<vmem>>, vector<1x128xf32>
      %c5_i32_67 = arith.constant 5 : i32
      %211 = arith.addi %180, %c5_i32_67 : i32
      %212 = arith.addi %0, %211 : i32
      %213 = arith.index_cast %212 : i32 to index
      %214 = memref.load %arg2[%213] : memref<1824xi32, #tpu.memory_space<smem>>
      %215 = arith.index_cast %214 : i32 to index
      %c0_68 = arith.constant 0 : index
      %216 = vector.load %arg3[%215, %c0_68] : memref<208x128xf32, #tpu.memory_space<vmem>>, vector<1x128xf32>
      %217 = arith.maximumf %186, %192 : vector<1x128xf32>
      %218 = arith.maximumf %198, %204 : vector<1x128xf32>
      %219 = arith.maximumf %210, %216 : vector<1x128xf32>
      %220 = arith.maximumf %217, %218 : vector<1x128xf32>
      %221 = arith.maximumf %220, %219 : vector<1x128xf32>
      %c8_i32_69 = arith.constant 8 : i32
      %222 = arith.muli %arg5, %c8_i32_69 : i32
      %c5_i32_70 = arith.constant 5 : i32
      %223 = arith.addi %222, %c5_i32_70 : i32
      %c6_i32_71 = arith.constant 6 : i32
      %224 = arith.muli %223, %c6_i32_71 : i32
      %c0_i32_72 = arith.constant 0 : i32
      %225 = arith.addi %224, %c0_i32_72 : i32
      %226 = arith.addi %0, %225 : i32
      %227 = arith.index_cast %226 : i32 to index
      %228 = memref.load %arg2[%227] : memref<1824xi32, #tpu.memory_space<smem>>
      %229 = arith.index_cast %228 : i32 to index
      %c0_73 = arith.constant 0 : index
      %230 = vector.load %arg3[%229, %c0_73] : memref<208x128xf32, #tpu.memory_space<vmem>>, vector<1x128xf32>
      %c1_i32_74 = arith.constant 1 : i32
      %231 = arith.addi %224, %c1_i32_74 : i32
      %232 = arith.addi %0, %231 : i32
      %233 = arith.index_cast %232 : i32 to index
      %234 = memref.load %arg2[%233] : memref<1824xi32, #tpu.memory_space<smem>>
      %235 = arith.index_cast %234 : i32 to index
      %c0_75 = arith.constant 0 : index
      %236 = vector.load %arg3[%235, %c0_75] : memref<208x128xf32, #tpu.memory_space<vmem>>, vector<1x128xf32>
      %c2_i32_76 = arith.constant 2 : i32
      %237 = arith.addi %224, %c2_i32_76 : i32
      %238 = arith.addi %0, %237 : i32
      %239 = arith.index_cast %238 : i32 to index
      %240 = memref.load %arg2[%239] : memref<1824xi32, #tpu.memory_space<smem>>
      %241 = arith.index_cast %240 : i32 to index
      %c0_77 = arith.constant 0 : index
      %242 = vector.load %arg3[%241, %c0_77] : memref<208x128xf32, #tpu.memory_space<vmem>>, vector<1x128xf32>
      %c3_i32_78 = arith.constant 3 : i32
      %243 = arith.addi %224, %c3_i32_78 : i32
      %244 = arith.addi %0, %243 : i32
      %245 = arith.index_cast %244 : i32 to index
      %246 = memref.load %arg2[%245] : memref<1824xi32, #tpu.memory_space<smem>>
      %247 = arith.index_cast %246 : i32 to index
      %c0_79 = arith.constant 0 : index
      %248 = vector.load %arg3[%247, %c0_79] : memref<208x128xf32, #tpu.memory_space<vmem>>, vector<1x128xf32>
      %c4_i32_80 = arith.constant 4 : i32
      %249 = arith.addi %224, %c4_i32_80 : i32
      %250 = arith.addi %0, %249 : i32
      %251 = arith.index_cast %250 : i32 to index
      %252 = memref.load %arg2[%251] : memref<1824xi32, #tpu.memory_space<smem>>
      %253 = arith.index_cast %252 : i32 to index
      %c0_81 = arith.constant 0 : index
      %254 = vector.load %arg3[%253, %c0_81] : memref<208x128xf32, #tpu.memory_space<vmem>>, vector<1x128xf32>
      %c5_i32_82 = arith.constant 5 : i32
      %255 = arith.addi %224, %c5_i32_82 : i32
      %256 = arith.addi %0, %255 : i32
      %257 = arith.index_cast %256 : i32 to index
      %258 = memref.load %arg2[%257] : memref<1824xi32, #tpu.memory_space<smem>>
      %259 = arith.index_cast %258 : i32 to index
      %c0_83 = arith.constant 0 : index
      %260 = vector.load %arg3[%259, %c0_83] : memref<208x128xf32, #tpu.memory_space<vmem>>, vector<1x128xf32>
      %261 = arith.maximumf %230, %236 : vector<1x128xf32>
      %262 = arith.maximumf %242, %248 : vector<1x128xf32>
      %263 = arith.maximumf %254, %260 : vector<1x128xf32>
      %264 = arith.maximumf %261, %262 : vector<1x128xf32>
      %265 = arith.maximumf %264, %263 : vector<1x128xf32>
      %c8_i32_84 = arith.constant 8 : i32
      %266 = arith.muli %arg5, %c8_i32_84 : i32
      %c6_i32_85 = arith.constant 6 : i32
      %267 = arith.addi %266, %c6_i32_85 : i32
      %c6_i32_86 = arith.constant 6 : i32
      %268 = arith.muli %267, %c6_i32_86 : i32
      %c0_i32_87 = arith.constant 0 : i32
      %269 = arith.addi %268, %c0_i32_87 : i32
      %270 = arith.addi %0, %269 : i32
      %271 = arith.index_cast %270 : i32 to index
      %272 = memref.load %arg2[%271] : memref<1824xi32, #tpu.memory_space<smem>>
      %273 = arith.index_cast %272 : i32 to index
      %c0_88 = arith.constant 0 : index
      %274 = vector.load %arg3[%273, %c0_88] : memref<208x128xf32, #tpu.memory_space<vmem>>, vector<1x128xf32>
      %c1_i32_89 = arith.constant 1 : i32
      %275 = arith.addi %268, %c1_i32_89 : i32
      %276 = arith.addi %0, %275 : i32
      %277 = arith.index_cast %276 : i32 to index
      %278 = memref.load %arg2[%277] : memref<1824xi32, #tpu.memory_space<smem>>
      %279 = arith.index_cast %278 : i32 to index
      %c0_90 = arith.constant 0 : index
      %280 = vector.load %arg3[%279, %c0_90] : memref<208x128xf32, #tpu.memory_space<vmem>>, vector<1x128xf32>
      %c2_i32_91 = arith.constant 2 : i32
      %281 = arith.addi %268, %c2_i32_91 : i32
      %282 = arith.addi %0, %281 : i32
      %283 = arith.index_cast %282 : i32 to index
      %284 = memref.load %arg2[%283] : memref<1824xi32, #tpu.memory_space<smem>>
      %285 = arith.index_cast %284 : i32 to index
      %c0_92 = arith.constant 0 : index
      %286 = vector.load %arg3[%285, %c0_92] : memref<208x128xf32, #tpu.memory_space<vmem>>, vector<1x128xf32>
      %c3_i32_93 = arith.constant 3 : i32
      %287 = arith.addi %268, %c3_i32_93 : i32
      %288 = arith.addi %0, %287 : i32
      %289 = arith.index_cast %288 : i32 to index
      %290 = memref.load %arg2[%289] : memref<1824xi32, #tpu.memory_space<smem>>
      %291 = arith.index_cast %290 : i32 to index
      %c0_94 = arith.constant 0 : index
      %292 = vector.load %arg3[%291, %c0_94] : memref<208x128xf32, #tpu.memory_space<vmem>>, vector<1x128xf32>
      %c4_i32_95 = arith.constant 4 : i32
      %293 = arith.addi %268, %c4_i32_95 : i32
      %294 = arith.addi %0, %293 : i32
      %295 = arith.index_cast %294 : i32 to index
      %296 = memref.load %arg2[%295] : memref<1824xi32, #tpu.memory_space<smem>>
      %297 = arith.index_cast %296 : i32 to index
      %c0_96 = arith.constant 0 : index
      %298 = vector.load %arg3[%297, %c0_96] : memref<208x128xf32, #tpu.memory_space<vmem>>, vector<1x128xf32>
      %c5_i32_97 = arith.constant 5 : i32
      %299 = arith.addi %268, %c5_i32_97 : i32
      %300 = arith.addi %0, %299 : i32
      %301 = arith.index_cast %300 : i32 to index
      %302 = memref.load %arg2[%301] : memref<1824xi32, #tpu.memory_space<smem>>
      %303 = arith.index_cast %302 : i32 to index
      %c0_98 = arith.constant 0 : index
      %304 = vector.load %arg3[%303, %c0_98] : memref<208x128xf32, #tpu.memory_space<vmem>>, vector<1x128xf32>
      %305 = arith.maximumf %274, %280 : vector<1x128xf32>
      %306 = arith.maximumf %286, %292 : vector<1x128xf32>
      %307 = arith.maximumf %298, %304 : vector<1x128xf32>
      %308 = arith.maximumf %305, %306 : vector<1x128xf32>
      %309 = arith.maximumf %308, %307 : vector<1x128xf32>
      %c8_i32_99 = arith.constant 8 : i32
      %310 = arith.muli %arg5, %c8_i32_99 : i32
      %c7_i32 = arith.constant 7 : i32
      %311 = arith.addi %310, %c7_i32 : i32
      %c6_i32_100 = arith.constant 6 : i32
      %312 = arith.muli %311, %c6_i32_100 : i32
      %c0_i32_101 = arith.constant 0 : i32
      %313 = arith.addi %312, %c0_i32_101 : i32
      %314 = arith.addi %0, %313 : i32
      %315 = arith.index_cast %314 : i32 to index
      %316 = memref.load %arg2[%315] : memref<1824xi32, #tpu.memory_space<smem>>
      %317 = arith.index_cast %316 : i32 to index
      %c0_102 = arith.constant 0 : index
      %318 = vector.load %arg3[%317, %c0_102] : memref<208x128xf32, #tpu.memory_space<vmem>>, vector<1x128xf32>
      %c1_i32_103 = arith.constant 1 : i32
      %319 = arith.addi %312, %c1_i32_103 : i32
      %320 = arith.addi %0, %319 : i32
      %321 = arith.index_cast %320 : i32 to index
      %322 = memref.load %arg2[%321] : memref<1824xi32, #tpu.memory_space<smem>>
      %323 = arith.index_cast %322 : i32 to index
      %c0_104 = arith.constant 0 : index
      %324 = vector.load %arg3[%323, %c0_104] : memref<208x128xf32, #tpu.memory_space<vmem>>, vector<1x128xf32>
      %c2_i32_105 = arith.constant 2 : i32
      %325 = arith.addi %312, %c2_i32_105 : i32
      %326 = arith.addi %0, %325 : i32
      %327 = arith.index_cast %326 : i32 to index
      %328 = memref.load %arg2[%327] : memref<1824xi32, #tpu.memory_space<smem>>
      %329 = arith.index_cast %328 : i32 to index
      %c0_106 = arith.constant 0 : index
      %330 = vector.load %arg3[%329, %c0_106] : memref<208x128xf32, #tpu.memory_space<vmem>>, vector<1x128xf32>
      %c3_i32_107 = arith.constant 3 : i32
      %331 = arith.addi %312, %c3_i32_107 : i32
      %332 = arith.addi %0, %331 : i32
      %333 = arith.index_cast %332 : i32 to index
      %334 = memref.load %arg2[%333] : memref<1824xi32, #tpu.memory_space<smem>>
      %335 = arith.index_cast %334 : i32 to index
      %c0_108 = arith.constant 0 : index
      %336 = vector.load %arg3[%335, %c0_108] : memref<208x128xf32, #tpu.memory_space<vmem>>, vector<1x128xf32>
      %c4_i32_109 = arith.constant 4 : i32
      %337 = arith.addi %312, %c4_i32_109 : i32
      %338 = arith.addi %0, %337 : i32
      %339 = arith.index_cast %338 : i32 to index
      %340 = memref.load %arg2[%339] : memref<1824xi32, #tpu.memory_space<smem>>
      %341 = arith.index_cast %340 : i32 to index
      %c0_110 = arith.constant 0 : index
      %342 = vector.load %arg3[%341, %c0_110] : memref<208x128xf32, #tpu.memory_space<vmem>>, vector<1x128xf32>
      %c5_i32_111 = arith.constant 5 : i32
      %343 = arith.addi %312, %c5_i32_111 : i32
      %344 = arith.addi %0, %343 : i32
      %345 = arith.index_cast %344 : i32 to index
      %346 = memref.load %arg2[%345] : memref<1824xi32, #tpu.memory_space<smem>>
      %347 = arith.index_cast %346 : i32 to index
      %c0_112 = arith.constant 0 : index
      %348 = vector.load %arg3[%347, %c0_112] : memref<208x128xf32, #tpu.memory_space<vmem>>, vector<1x128xf32>
      %349 = arith.maximumf %318, %324 : vector<1x128xf32>
      %350 = arith.maximumf %330, %336 : vector<1x128xf32>
      %351 = arith.maximumf %342, %348 : vector<1x128xf32>
      %352 = arith.maximumf %349, %350 : vector<1x128xf32>
      %353 = arith.maximumf %352, %351 : vector<1x128xf32>
      %354 = tpu.concatenate %45, %89, %133, %177, %221, %265, %309, %353 in 0 : vector<1x128xf32>, vector<1x128xf32>, vector<1x128xf32>, vector<1x128xf32>, vector<1x128xf32>, vector<1x128xf32>, vector<1x128xf32>, vector<1x128xf32> -> vector<8x128xf32>
      %c8_i32_113 = arith.constant 8 : i32
      %355 = arith.muli %arg5, %c8_i32_113 : i32
      %356 = tpu.assume_multiple %355, 8 : i32
      %357 = arith.index_cast %356 : i32 to index
      %c0_114 = arith.constant 0 : index
      %358 = vector.load %arg4[%357, %c0_114] : memref<152x128xf32, #tpu.memory_space<vmem>>, vector<8x128xf32>
      tpu.vector_store %arg4[%357, %c0_114], %354 {strides = array<i32>} : memref<152x128xf32, #tpu.memory_space<vmem>>, vector<8x128xf32>,
    }
    %c19_i32_0 = arith.constant 19 : i32
    return
  }
  func.func @transform_0(%arg0: i32, %arg1: i32, %arg2: memref<1824xi32, #tpu.memory_space<smem>>) -> (i32, i32) {
    %c0_i32 = arith.constant 0 : i32
    %c0_i32_0 = arith.constant 0 : i32
    return %c0_i32, %arg0 : i32, i32
  }
  func.func @transform_1(%arg0: i32, %arg1: i32, %arg2: memref<1824xi32, #tpu.memory_space<smem>>) -> (i32, i32) {
    %c0_i32 = arith.constant 0 : i32
    return %arg1, %arg0 : i32, i32
  }
}

</mosaic_0001>

<llo_original>
// kernel: tpu_custom_call.1
$region0: #{tpu_custom_call.1}
  #allocation0 [shape = 'u32[]', space=smem, size = 0x4, offset = 0x4, fixed_abs, tag = 'smem constant byte address 0x4 - core index']
  #allocation1 [shape = 'u32[72,128]{1,0:T(1,128)}', space=vmem, size = 0x9000, scoped, tag = 'internal scratch']
  #allocation2 [shape = 's32[1]{0}', space=sflag, size = 0x4, scoped, tag = 'scoped memory for tpu_custom_call.1']
  #allocation3 [shape = 'u8[7680]{0}', space=smem, size = 0x1e00, scoped, tag = 'prefetched SMEM operand 0']
  %s0 = inlined_call_operand.hbm [shape: s32[1824], index: 0, kind: input, shape index: {}]
  %s1 = inlined_call_operand.hbm [shape: f32[208,128], index: 1, kind: input, shape index: {}]
  %s2 = inlined_call_operand.hbm [shape: f32[304,128], index: 2, kind: output, shape index: {}]
  %s3 = sld [smem:[#allocation0]]
  $region48: #{tpu_custom_call.1} parent=0
    _
  %s5 = ssub.s32 1, %s3
  %s6 = scalar_select 0, %s5, %s3
  %s8 = sshll.u32 %s0, 4
  %s9 = int_to_ptr.hbm [resolvable:$true] %s8
  %11 = dma.hbm_to_smem %s9, 240, [#allocation3], [#allocation2]
  %13 = dma.done [#allocation2], 240
  %14 = sfence
  $region1: #{tpu_custom_call.1} parent=0
    #allocation4 [shape = 'u8[106496]{0}', space=vmem, size = 0x1a000, scoped, tag = 'input window, operand 1, single buffered']
    #allocation5 [shape = 's32[2]{0}', space=sflag, size = 0x8, scoped, tag = 'scoped memory for tpu_custom_call.1']
    #allocation6 [shape = 's32[2]{0}', space=sflag, size = 0x8, scoped, tag = 'scoped memory for tpu_custom_call.1']
    #allocation7 [shape = 'u8[155648]{0}', space=vmem, size = 0x26000, scoped, tag = 'output window, operand 0']
    %15 = vsyncpa [#allocation5], 0
    %16 = vsyncpa [#allocation6], 0
    %s17 = scalar_lea.sflag [#allocation6], 1
    %18 = vsyncpa %s17, 0
    loop: start=0, step=1, limit=4
    $region2: #{tpu_custom_call.1} parent=1 // loop_pre_header
      _
    $region3: #{tpu_custom_call.1} parent=1 // loop_header
      %s20 = sphi 0, %s24
      %p21 = scmp.ge.s32.totalorder %s20, 4
      %s27 = sphi 0, %s39
      %s28 = sphi 0, %s35
      %s29 = sphi 0, %s27
      %s30 = sphi 0, %s28
      %s31 = sphi 0, %s29
      %s32 = sphi 0, %s30
      %s42 = sphi 0, %s44
      %s45 = sphi 0, %s42
      %s46 = sphi 0, %s45
      %s62 = sphi 0, %s46
      %s70 = sphi 0, %s72
      %s73 = sphi 0, %s70
      %s74 = sphi 0, %s73
      %s90 = sphi 0, %s74
    $region4: #{tpu_custom_call.1} parent=1 // loop_header_branch
      %23 = sbr.rel (%p21) target = $region8
    $region5: #{tpu_custom_call.1} parent=1 // loop_body
      %s25 = ssub.s32 %s20, 1
      %s26 = ssub.s32 %s20, 2
      %s33 = sadd.s32 1, %s28
      %p34 = scmp.ge.s32.totalorder %s33, 2
      %s35 = scalar_select %p34, 0, %s33
      %s36 = sadd.s32 1, %s27
      %s37 = scalar_select %p34, %s36, %s27
      %p38 = scmp.ge.s32.totalorder %s37, 1
      %s39 = scalar_select %p38, 0, %s37
      %s40 = ssub.s32 %s27, %s39
      %p41 = scmp.eq.s32.totalorder %s40, 0
      %s43 = sadd.s32 %s42, 1
      %s44 = scalar_select %p41, %s42, %s43
      %p47 = pneg %p41
      %p48 = scmp.eq.s32.totalorder %s20, 1
      %p49 = por %p47, %p48
      %p50 = scmp.ne.s32.totalorder %s42, %s45
      %p51 = scmp.eq.s32.totalorder %s20, 0
      %p52 = por %p50, %p51
      %p53 = scmp.ne.s32.totalorder %s42, %s45
      %p54 = scmp.eq.s32.totalorder %s25, 1
      %p55 = por %p53, %p54
      %p56 = scmp.ne.s32.totalorder %s45, %s46
      %p57 = scmp.eq.s32.totalorder %s25, 0
      %p58 = por %p56, %p57
      %p59 = scmp.ne.s32.totalorder %s45, %s46
      %p60 = scmp.eq.s32.totalorder %s26, 1
      %p61 = por %p59, %p60
      %p63 = scmp.ne.s32.totalorder %s46, %s62
      %p64 = scmp.eq.s32.totalorder %s26, 0
      %p65 = por %p63, %p64
      %s66 = ssub.s32 %s28, %s35
      %s67 = ssub.s32 %s27, %s39
      %s68 = sor.u32 %s66, %s67
      %p69 = scmp.eq.s32.totalorder %s68, 0
      %s71 = sadd.s32 %s70, 1
      %s72 = scalar_select %p69, %s70, %s71
      %p75 = pneg %p69
      %p76 = scmp.eq.s32.totalorder %s20, 1
      %p77 = por %p75, %p76
      %p78 = scmp.ne.s32.totalorder %s70, %s73
      %p79 = scmp.eq.s32.totalorder %s20, 0
      %p80 = por %p78, %p79
      %p81 = scmp.ne.s32.totalorder %s70, %s73
      %p82 = scmp.eq.s32.totalorder %s25, 1
      %p83 = por %p81, %p82
      %p84 = scmp.ne.s32.totalorder %s73, %s74
      %p85 = scmp.eq.s32.totalorder %s25, 0
      %p86 = por %p84, %p85
      %p87 = scmp.ne.s32.totalorder %s73, %s74
      %p88 = scmp.eq.s32.totalorder %s26, 1
      %p89 = por %p87, %p88
      %p91 = scmp.ne.s32.totalorder %s74, %s90
      %p92 = scmp.eq.s32.totalorder %s26, 0
      %p93 = por %p91, %p92
      %p94 = scmp.le.s32.totalorder 1, %s20
      %p95 = scmp.lt.s32.totalorder %s20, 3
      %p96 = pnand %p94, %p95
      %p97 = pneg %p96
      // Predicated region
      $region9: #{tpu_custom_call.1} parent=5 // pred_check
        _
      $region10: #{tpu_custom_call.1} parent=5 // pred_check_branch
        %99 = sbr.rel (%p96) target = $region12
      $region11: #{tpu_custom_call.1} parent=5 // pred_region
        %s100 = ssub.s32 %s20, 1
        // Predicated region
        $region13: #{tpu_custom_call.1} parent=11 // pred_check
          %p101 = pneg %p58
        $region14: #{tpu_custom_call.1} parent=11 // pred_check_branch
          %103 = sbr.rel (%p101) target = $region16
        $region15: #{tpu_custom_call.1} parent=11 // pred_region
          %105 = vsyncadd [#allocation5], 0
          %s106 = smul.addr %s29, 8
          %s107 = scalar_lea.hbm %s1, %s106
          %s108 = sshll.u32 %s107, 4
          %s109 = int_to_ptr.hbm [resolvable:$true] %s108
          %s110 = sshll.u32 [#allocation4], 4
          %s111 = int_to_ptr.vmem [resolvable:$true] %s110
          %116 = dma.hbm_to_vmem [thread:$0]  %s109, 3328, %s111, [#allocation5], 128, 128, 8
        $region16: #{tpu_custom_call.1} parent=11 // pred_fallthru
          _
      $region12: #{tpu_custom_call.1} parent=5 // pred_fallthru
        _
      %p117 = scmp.lt.s32.totalorder %s20, 2
      // Predicated region
      $region17: #{tpu_custom_call.1} parent=5 // pred_check
        %p118 = pneg %p117
      $region18: #{tpu_custom_call.1} parent=5 // pred_check_branch
        %120 = sbr.rel (%p118) target = $region20
      $region19: #{tpu_custom_call.1} parent=5 // pred_region
        _
      $region20: #{tpu_custom_call.1} parent=5 // pred_fallthru
        _
      %p121 = scmp.le.s32.totalorder 1, %s20
      %p122 = scmp.lt.s32.totalorder %s20, 3
      %p123 = pnand %p121, %p122
      %p124 = pneg %p123
      // Predicated region
      $region21: #{tpu_custom_call.1} parent=5 // pred_check
        _
      $region22: #{tpu_custom_call.1} parent=5 // pred_check_branch
        %126 = sbr.rel (%p123) target = $region24
      $region23: #{tpu_custom_call.1} parent=5 // pred_region
        %s127 = ssub.s32 %s20, 1
        // Predicated region
        $region25: #{tpu_custom_call.1} parent=23 // pred_check
          %p128 = pneg %p58
        $region26: #{tpu_custom_call.1} parent=23 // pred_check_branch
          %130 = sbr.rel (%p128) target = $region28
        $region27: #{tpu_custom_call.1} parent=23 // pred_region
          %132 = dma.done [#allocation5], 3328
        $region28: #{tpu_custom_call.1} parent=23 // pred_fallthru
          _
        %p133 = pneg %p58
        %p134 = pneg %p55
        %p135 = pneg %p86
        %p136 = pneg %p83
        %s137 = sand.u32 %s73, 1
        %s138 = scalar_lea.sflag [#allocation6], %s137
        %s139 = sand.u32 %s73, 1
        %s140 = smul.addr %s139, 152
        %s141 = scalar_lea.vmem [#allocation7], %s140
        %s142 = smul.u32 19, %s30
        %s143 = smul.u32 %s30, 912
        loop: start=0, step=1, limit=19
        $region29: #{tpu_custom_call.1} parent=23 // loop_pre_header
          _
        $region30: #{tpu_custom_call.1} parent=23 // loop_header
          %s145 = sphi 0, %s149
          %p146 = scmp.ge.s32.totalorder %s145, 19
        $region31: #{tpu_custom_call.1} parent=23 // loop_header_branch
          %148 = sbr.rel (%p146) target = $region35
        $region32: #{tpu_custom_call.1} parent=23 // loop_body
          %s150 = smul.u32 %s145, 48
          %s151 = sadd.s32 %s143, %s150
          %s152 = sld [smem:[#allocation3 + %s151]]
          %s153 = scalar_lea.vmem [#allocation4], %s152
          %v154 = vld [vmem:[%s153] sm:$0x1]
          %s155 = sadd.s32 %s150, 1
          %s156 = sadd.s32 %s143, %s155
          %s157 = sld [smem:[#allocation3 + %s156]]
          %s158 = scalar_lea.vmem [#allocation4], %s157
          %v159 = vld [vmem:[%s158] sm:$0x1]
          %s160 = sadd.s32 %s150, 2
          %s161 = sadd.s32 %s143, %s160
          %s162 = sld [smem:[#allocation3 + %s161]]
          %s163 = scalar_lea.vmem [#allocation4], %s162
          %v164 = vld [vmem:[%s163] sm:$0x1]
          %s165 = sadd.s32 %s150, 3
          %s166 = sadd.s32 %s143, %s165
          %s167 = sld [smem:[#allocation3 + %s166]]
          %s168 = scalar_lea.vmem [#allocation4], %s167
          %v169 = vld [vmem:[%s168] sm:$0x1]
          %s170 = sadd.s32 %s150, 4
          %s171 = sadd.s32 %s143, %s170
          %s172 = sld [smem:[#allocation3 + %s171]]
          %s173 = scalar_lea.vmem [#allocation4], %s172
          %v174 = vld [vmem:[%s173] sm:$0x1]
          %s175 = sadd.s32 %s150, 5
          %s176 = sadd.s32 %s143, %s175
          %s177 = sld [smem:[#allocation3 + %s176]]
          %s178 = scalar_lea.vmem [#allocation4], %s177
          %v179 = vld [vmem:[%s178] sm:$0x1]
          %v180 = vmax.f32 %v154, %v159
          %v181 = vmax.f32 %v164, %v169
          %v182 = vmax.f32 %v174, %v179
          %v183 = vmax.f32 %v180, %v181
          %v184 = vmax.f32 %v183, %v182
          %s185 = smul.u32 %s145, 8
          %s186 = sadd.s32 %s185, 1
          %s187 = smul.u32 %s186, 6
          %s188 = sadd.s32 %s143, %s187
          %s189 = sld [smem:[#allocation3 + %s188]]
          %s190 = scalar_lea.vmem [#allocation4], %s189
          %v191 = vld [vmem:[%s190] sm:$0x1]
          %s192 = sadd.s32 %s187, 1
          %s193 = sadd.s32 %s143, %s192
          %s194 = sld [smem:[#allocation3 + %s193]]
          %s195 = scalar_lea.vmem [#allocation4], %s194
          %v196 = vld [vmem:[%s195] sm:$0x1]
          %s197 = sadd.s32 %s187, 2
          %s198 = sadd.s32 %s143, %s197
          %s199 = sld [smem:[#allocation3 + %s198]]
          %s200 = scalar_lea.vmem [#allocation4], %s199
          %v201 = vld [vmem:[%s200] sm:$0x1]
          %s202 = sadd.s32 %s187, 3
          %s203 = sadd.s32 %s143, %s202
          %s204 = sld [smem:[#allocation3 + %s203]]
          %s205 = scalar_lea.vmem [#allocation4], %s204
          %v206 = vld [vmem:[%s205] sm:$0x1]
          %s207 = sadd.s32 %s187, 4
          %s208 = sadd.s32 %s143, %s207
          %s209 = sld [smem:[#allocation3 + %s208]]
          %s210 = scalar_lea.vmem [#allocation4], %s209
          %v211 = vld [vmem:[%s210] sm:$0x1]
          %s212 = sadd.s32 %s187, 5
          %s213 = sadd.s32 %s143, %s212
          %s214 = sld [smem:[#allocation3 + %s213]]
          %s215 = scalar_lea.vmem [#allocation4], %s214
          %v216 = vld [vmem:[%s215] sm:$0x1]
          %v217 = vmax.f32 %v191, %v196
          %v218 = vmax.f32 %v201, %v206
          %v219 = vmax.f32 %v211, %v216
          %v220 = vmax.f32 %v217, %v218
          %v221 = vmax.f32 %v220, %v219
          %s222 = sadd.s32 %s185, 2
          %s223 = smul.u32 %s222, 6
          %s224 = sadd.s32 %s143, %s223
          %s225 = sld [smem:[#allocation3 + %s224]]
          %s226 = scalar_lea.vmem [#allocation4], %s225
          %v227 = vld [vmem:[%s226] sm:$0x1]
          %s228 = sadd.s32 %s223, 1
          %s229 = sadd.s32 %s143, %s228
          %s230 = sld [smem:[#allocation3 + %s229]]
          %s231 = scalar_lea.vmem [#allocation4], %s230
          %v232 = vld [vmem:[%s231] sm:$0x1]
          %s233 = sadd.s32 %s223, 2
          %s234 = sadd.s32 %s143, %s233
          %s235 = sld [smem:[#allocation3 + %s234]]
          %s236 = scalar_lea.vmem [#allocation4], %s235
          %v237 = vld [vmem:[%s236] sm:$0x1]
          %s238 = sadd.s32 %s223, 3
          %s239 = sadd.s32 %s143, %s238
          %s240 = sld [smem:[#allocation3 + %s239]]
          %s241 = scalar_lea.vmem [#allocation4], %s240
          %v242 = vld [vmem:[%s241] sm:$0x1]
          %s243 = sadd.s32 %s223, 4
          %s244 = sadd.s32 %s143, %s243
          %s245 = sld [smem:[#allocation3 + %s244]]
          %s246 = scalar_lea.vmem [#allocation4], %s245
          %v247 = vld [vmem:[%s246] sm:$0x1]
          %s248 = sadd.s32 %s223, 5
          %s249 = sadd.s32 %s143, %s248
          %s250 = sld [smem:[#allocation3 + %s249]]
          %s251 = scalar_lea.vmem [#allocation4], %s250
          %v252 = vld [vmem:[%s251] sm:$0x1]
          %v253 = vmax.f32 %v227, %v232
          %v254 = vmax.f32 %v237, %v242
          %v255 = vmax.f32 %v247, %v252
          %v256 = vmax.f32 %v253, %v254
          %v257 = vmax.f32 %v256, %v255
          %s258 = sadd.s32 %s185, 3
          %s259 = smul.u32 %s258, 6
          %s260 = sadd.s32 %s143, %s259
          %s261 = sld [smem:[#allocation3 + %s260]]
          %s262 = scalar_lea.vmem [#allocation4], %s261
          %v263 = vld [vmem:[%s262] sm:$0x1]
          %s264 = sadd.s32 %s259, 1
          %s265 = sadd.s32 %s143, %s264
          %s266 = sld [smem:[#allocation3 + %s265]]
          %s267 = scalar_lea.vmem [#allocation4], %s266
          %v268 = vld [vmem:[%s267] sm:$0x1]
          %s269 = sadd.s32 %s259, 2
          %s270 = sadd.s32 %s143, %s269
          %s271 = sld [smem:[#allocation3 + %s270]]
          %s272 = scalar_lea.vmem [#allocation4], %s271
          %v273 = vld [vmem:[%s272] sm:$0x1]
          %s274 = sadd.s32 %s259, 3
          %s275 = sadd.s32 %s143, %s274
          %s276 = sld [smem:[#allocation3 + %s275]]
          %s277 = scalar_lea.vmem [#allocation4], %s276
          %v278 = vld [vmem:[%s277] sm:$0x1]
          %s279 = sadd.s32 %s259, 4
          %s280 = sadd.s32 %s143, %s279
          %s281 = sld [smem:[#allocation3 + %s280]]
          %s282 = scalar_lea.vmem [#allocation4], %s281
          %v283 = vld [vmem:[%s282] sm:$0x1]
          %s284 = sadd.s32 %s259, 5
          %s285 = sadd.s32 %s143, %s284
          %s286 = sld [smem:[#allocation3 + %s285]]
          %s287 = scalar_lea.vmem [#allocation4], %s286
          %v288 = vld [vmem:[%s287] sm:$0x1]
          %v289 = vmax.f32 %v263, %v268
          %v290 = vmax.f32 %v273, %v278
          %v291 = vmax.f32 %v283, %v288
          %v292 = vmax.f32 %v289, %v290
          %v293 = vmax.f32 %v292, %v291
          %s294 = sadd.s32 %s185, 4
          %s295 = smul.u32 %s294, 6
          %s296 = sadd.s32 %s143, %s295
          %s297 = sld [smem:[#allocation3 + %s296]]
          %s298 = scalar_lea.vmem [#allocation4], %s297
          %v299 = vld [vmem:[%s298] sm:$0x1]
          %s300 = sadd.s32 %s295, 1
          %s301 = sadd.s32 %s143, %s300
          %s302 = sld [smem:[#allocation3 + %s301]]
          %s303 = scalar_lea.vmem [#allocation4], %s302
          %v304 = vld [vmem:[%s303] sm:$0x1]
          %s305 = sadd.s32 %s295, 2
          %s306 = sadd.s32 %s143, %s305
          %s307 = sld [smem:[#allocation3 + %s306]]
          %s308 = scalar_lea.vmem [#allocation4], %s307
          %v309 = vld [vmem:[%s308] sm:$0x1]
          %s310 = sadd.s32 %s295, 3
          %s311 = sadd.s32 %s143, %s310
          %s312 = sld [smem:[#allocation3 + %s311]]
          %s313 = scalar_lea.vmem [#allocation4], %s312
          %v314 = vld [vmem:[%s313] sm:$0x1]
          %s315 = sadd.s32 %s295, 4
          %s316 = sadd.s32 %s143, %s315
          %s317 = sld [smem:[#allocation3 + %s316]]
          %s318 = scalar_lea.vmem [#allocation4], %s317
          %v319 = vld [vmem:[%s318] sm:$0x1]
          %s320 = sadd.s32 %s295, 5
          %s321 = sadd.s32 %s143, %s320
          %s322 = sld [smem:[#allocation3 + %s321]]
          %s323 = scalar_lea.vmem [#allocation4], %s322
          %v324 = vld [vmem:[%s323] sm:$0x1]
          %v325 = vmax.f32 %v299, %v304
          %v326 = vmax.f32 %v309, %v314
          %v327 = vmax.f32 %v319, %v324
          %v328 = vmax.f32 %v325, %v326
          %v329 = vmax.f32 %v328, %v327
          %s330 = sadd.s32 %s185, 5
          %s331 = smul.u32 %s330, 6
          %s332 = sadd.s32 %s143, %s331
          %s333 = sld [smem:[#allocation3 + %s332]]
          %s334 = scalar_lea.vmem [#allocation4], %s333
          %v335 = vld [vmem:[%s334] sm:$0x1]
          %s336 = sadd.s32 %s331, 1
          %s337 = sadd.s32 %s143, %s336
          %s338 = sld [smem:[#allocation3 + %s337]]
          %s339 = scalar_lea.vmem [#allocation4], %s338
          %v340 = vld [vmem:[%s339] sm:$0x1]
          %s341 = sadd.s32 %s331, 2
          %s342 = sadd.s32 %s143, %s341
          %s343 = sld [smem:[#allocation3 + %s342]]
          %s344 = scalar_lea.vmem [#allocation4], %s343
          %v345 = vld [vmem:[%s344] sm:$0x1]
          %s346 = sadd.s32 %s331, 3
          %s347 = sadd.s32 %s143, %s346
          %s348 = sld [smem:[#allocation3 + %s347]]
          %s349 = scalar_lea.vmem [#allocation4], %s348
          %v350 = vld [vmem:[%s349] sm:$0x1]
          %s351 = sadd.s32 %s331, 4
          %s352 = sadd.s32 %s143, %s351
          %s353 = sld [smem:[#allocation3 + %s352]]
          %s354 = scalar_lea.vmem [#allocation4], %s353
          %v355 = vld [vmem:[%s354] sm:$0x1]
          %s356 = sadd.s32 %s331, 5
          %s357 = sadd.s32 %s143, %s356
          %s358 = sld [smem:[#allocation3 + %s357]]
          %s359 = scalar_lea.vmem [#allocation4], %s358
          %v360 = vld [vmem:[%s359] sm:$0x1]
          %v361 = vmax.f32 %v335, %v340
          %v362 = vmax.f32 %v345, %v350
          %v363 = vmax.f32 %v355, %v360
          %v364 = vmax.f32 %v361, %v362
          %v365 = vmax.f32 %v364, %v363
          %s366 = sadd.s32 %s185, 6
          %s367 = smul.u32 %s366, 6
          %s368 = sadd.s32 %s143, %s367
          %s369 = sld [smem:[#allocation3 + %s368]]
          %s370 = scalar_lea.vmem [#allocation4], %s369
          %v371 = vld [vmem:[%s370] sm:$0x1]
          %s372 = sadd.s32 %s367, 1
          %s373 = sadd.s32 %s143, %s372
          %s374 = sld [smem:[#allocation3 + %s373]]
          %s375 = scalar_lea.vmem [#allocation4], %s374
          %v376 = vld [vmem:[%s375] sm:$0x1]
          %s377 = sadd.s32 %s367, 2
          %s378 = sadd.s32 %s143, %s377
          %s379 = sld [smem:[#allocation3 + %s378]]
          %s380 = scalar_lea.vmem [#allocation4], %s379
          %v381 = vld [vmem:[%s380] sm:$0x1]
          %s382 = sadd.s32 %s367, 3
          %s383 = sadd.s32 %s143, %s382
          %s384 = sld [smem:[#allocation3 + %s383]]
          %s385 = scalar_lea.vmem [#allocation4], %s384
          %v386 = vld [vmem:[%s385] sm:$0x1]
          %s387 = sadd.s32 %s367, 4
          %s388 = sadd.s32 %s143, %s387
          %s389 = sld [smem:[#allocation3 + %s388]]
          %s390 = scalar_lea.vmem [#allocation4], %s389
          %v391 = vld [vmem:[%s390] sm:$0x1]
          %s392 = sadd.s32 %s367, 5
          %s393 = sadd.s32 %s143, %s392
          %s394 = sld [smem:[#allocation3 + %s393]]
          %s395 = scalar_lea.vmem [#allocation4], %s394
          %v396 = vld [vmem:[%s395] sm:$0x1]
          %v397 = vmax.f32 %v371, %v376
          %v398 = vmax.f32 %v381, %v386
          %v399 = vmax.f32 %v391, %v396
          %v400 = vmax.f32 %v397, %v398
          %v401 = vmax.f32 %v400, %v399
          %s402 = sadd.s32 %s185, 7
          %s403 = smul.u32 %s402, 6
          %s404 = sadd.s32 %s143, %s403
          %s405 = sld [smem:[#allocation3 + %s404]]
          %s406 = scalar_lea.vmem [#allocation4], %s405
          %v407 = vld [vmem:[%s406] sm:$0x1]
          %s408 = sadd.s32 %s403, 1
          %s409 = sadd.s32 %s143, %s408
          %s410 = sld [smem:[#allocation3 + %s409]]
          %s411 = scalar_lea.vmem [#allocation4], %s410
          %v412 = vld [vmem:[%s411] sm:$0x1]
          %s413 = sadd.s32 %s403, 2
          %s414 = sadd.s32 %s143, %s413
          %s415 = sld [smem:[#allocation3 + %s414]]
          %s416 = scalar_lea.vmem [#allocation4], %s415
          %v417 = vld [vmem:[%s416] sm:$0x1]
          %s418 = sadd.s32 %s403, 3
          %s419 = sadd.s32 %s143, %s418
          %s420 = sld [smem:[#allocation3 + %s419]]
          %s421 = scalar_lea.vmem [#allocation4], %s420
          %v422 = vld [vmem:[%s421] sm:$0x1]
          %s423 = sadd.s32 %s403, 4
          %s424 = sadd.s32 %s143, %s423
          %s425 = sld [smem:[#allocation3 + %s424]]
          %s426 = scalar_lea.vmem [#allocation4], %s425
          %v427 = vld [vmem:[%s426] sm:$0x1]
          %s428 = sadd.s32 %s403, 5
          %s429 = sadd.s32 %s143, %s428
          %s430 = sld [smem:[#allocation3 + %s429]]
          %s431 = scalar_lea.vmem [#allocation4], %s430
          %v432 = vld [vmem:[%s431] sm:$0x1]
          %v433 = vmax.f32 %v407, %v412
          %v434 = vmax.f32 %v417, %v422
          %v435 = vmax.f32 %v427, %v432
          %v436 = vmax.f32 %v433, %v434
          %v437 = vmax.f32 %v436, %v435
          %v439 = vrot.slane %v221, 7
          %v442 = vrot.slane %v257, 6
          %v445 = vrot.slane %v293, 5
          %v448 = vrot.slane %v329, 4
          %v451 = vrot.slane %v365, 3
          %v454 = vrot.slane %v401, 2
          %v457 = vrot.slane %v437, 1
          %vm459 = vcmask 1040384
          %v460 = vsel %vm459, %v184, %v439
          %vm461 = vcmask 1041408
          %v462 = vsel %vm461, %v460, %v442
          %vm463 = vcmask 1042432
          %v464 = vsel %vm463, %v462, %v445
          %vm465 = vcmask 1043456
          %v466 = vsel %vm465, %v464, %v448
          %vm467 = vcmask 1044480
          %v468 = vsel %vm467, %v466, %v451
          %vm469 = vcmask 1045504
          %v470 = vsel %vm469, %v468, %v454
          %vm471 = vcmask 1046528
          %v472 = vsel %vm471, %v470, %v457
          %s473 = scalar_lea.vmem %s141, %s185 [#allocation7]
          %474 = vst [vmem:[%s473] sm:$0xff] %v472
        $region33: #{tpu_custom_call.1} parent=23 // loop_footer
          %s149 = sadd.s32 1, %s145
        $region34: #{tpu_custom_call.1} parent=23 // loop_footer_branch
          %144 = sbr.rel target = $region30
        $region35: #{tpu_custom_call.1} parent=23 // loop_exit
          _
        %s475 = sand.u32 %s73, 1
        %s476 = scalar_lea.sflag [#allocation6], %s475
        %s477 = sand.u32 %s73, 1
        %s478 = smul.addr %s477, 152
        %s479 = scalar_lea.vmem [#allocation7], %s478
        // Predicated region
        $region36: #{tpu_custom_call.1} parent=23 // pred_check
          %p480 = pneg %p83
        $region37: #{tpu_custom_call.1} parent=23 // pred_check_branch
          %482 = sbr.rel (%p480) target = $region39
        $region38: #{tpu_custom_call.1} parent=23 // pred_region
          %s483 = smul.u32 19, %s30
          %485 = vsyncadd %s476, 0
          %s486 = sadd.s32 %s29, %s483
          %s487 = smul.addr %s486, 8
          %s488 = scalar_lea.hbm %s2, %s487
          %s489 = sshll.u32 %s479, 4
          %s490 = int_to_ptr.vmem [resolvable:$true] %s489
          %s491 = sshll.u32 %s488, 4
          %s492 = int_to_ptr.hbm [resolvable:$true] %s491
          %497 = dma.vmem_to_hbm [thread:$0]  %s490, 2432, %s492, %s476, 128, 128, 8
        $region39: #{tpu_custom_call.1} parent=23 // pred_fallthru
          _
      $region24: #{tpu_custom_call.1} parent=5 // pred_fallthru
        _
      %p498 = scmp.le.s32.totalorder 2, %s20
      // Predicated region
      $region40: #{tpu_custom_call.1} parent=5 // pred_check
        %p499 = pneg %p498
      $region41: #{tpu_custom_call.1} parent=5 // pred_check_branch
        %501 = sbr.rel (%p499) target = $region43
      $region42: #{tpu_custom_call.1} parent=5 // pred_region
        %s502 = ssub.s32 %s20, 2
        // Predicated region
        $region44: #{tpu_custom_call.1} parent=42 // pred_check
          %p503 = pneg %p89
        $region45: #{tpu_custom_call.1} parent=42 // pred_check_branch
          %505 = sbr.rel (%p503) target = $region47
        $region46: #{tpu_custom_call.1} parent=42 // pred_region
          %s506 = sand.u32 %s74, 1
          %s507 = scalar_lea.sflag [#allocation6], %s506
          %s508 = sand.u32 %s74, 1
          %s509 = smul.addr %s508, 152
          %s510 = scalar_lea.vmem [#allocation7], %s509
          %512 = dma.done %s507, 2432
        $region47: #{tpu_custom_call.1} parent=42 // pred_fallthru
          _
      $region43: #{tpu_custom_call.1} parent=5 // pred_fallthru
        _
    $region6: #{tpu_custom_call.1} parent=1 // loop_footer
      %s24 = sadd.s32 1, %s20
    $region7: #{tpu_custom_call.1} parent=1 // loop_footer_branch
      %19 = sbr.rel target = $region3
    $region8: #{tpu_custom_call.1} parent=1 // loop_exit
      _
    %513 = vsyncpa [#allocation5], 1
    %s514 = scalar_lea.sflag [#allocation5], 1
    %515 = vsyncpa %s514, 1
    %516 = vsyncpa [#allocation6], 1
    %s517 = scalar_lea.sflag [#allocation6], 1
    %518 = vsyncpa %s517, 1

// kernel: tpu_custom_call.1
$region0: #{tpu_custom_call.1}
  #allocation0 [shape = 'u32[]', space=smem, size = 0x4, offset = 0x4, fixed_abs, tag = 'smem constant byte address 0x4 - core index']
  #allocation1 [shape = 'u32[72,128]{1,0:T(1,128)}', space=vmem, size = 0x9000, scoped, tag = 'internal scratch']
  #allocation2 [shape = 's32[1]{0}', space=sflag, size = 0x4, scoped, tag = 'scoped memory for tpu_custom_call.1']
  #allocation3 [shape = 'u8[7680]{0}', space=smem, size = 0x1e00, scoped, tag = 'prefetched SMEM operand 0']
  %s0 = inlined_call_operand.hbm [shape: s32[1824], index: 0, kind: input, shape index: {}]
  %s1 = inlined_call_operand.hbm [shape: f32[208,128], index: 1, kind: input, shape index: {}]
  %s2 = inlined_call_operand.hbm [shape: f32[304,128], index: 2, kind: output, shape index: {}]
  %s3 = sld [smem:[#allocation0]]
  $region48: #{tpu_custom_call.1} parent=0
    _
  %s5 = ssub.s32 1, %s3
  %s6 = scalar_select 0, %s5, %s3
  %s8 = sshll.u32 %s0, 4
  %s9 = int_to_ptr.hbm [resolvable:$true] %s8
  %11 = dma.hbm_to_smem %s9, 240, [#allocation3], [#allocation2]
  %13 = dma.done [#allocation2], 240
  %14 = sfence
  $region1: #{tpu_custom_call.1} parent=0
    #allocation4 [shape = 'u8[106496]{0}', space=vmem, size = 0x1a000, scoped, tag = 'input window, operand 1, single buffered']
    #allocation5 [shape = 's32[2]{0}', space=sflag, size = 0x8, scoped, tag = 'scoped memory for tpu_custom_call.1']
    #allocation6 [shape = 's32[2]{0}', space=sflag, size = 0x8, scoped, tag = 'scoped memory for tpu_custom_call.1']
    #allocation7 [shape = 'u8[155648]{0}', space=vmem, size = 0x26000, scoped, tag = 'output window, operand 0']
    %15 = vsyncpa [#allocation5], 0
    %16 = vsyncpa [#allocation6], 0
    %s17 = scalar_lea.sflag [#allocation6], 1
    %18 = vsyncpa %s17, 0
    loop: start=0, step=1, limit=4
    $region2: #{tpu_custom_call.1} parent=1 // loop_pre_header
      _
    $region3: #{tpu_custom_call.1} parent=1 // loop_header
      %s20 = sphi 0, %s24
      %p21 = scmp.ge.s32.totalorder %s20, 4
      %s27 = sphi 0, %s39
      %s28 = sphi 0, %s35
      %s29 = sphi 0, %s27
      %s30 = sphi 0, %s28
      %s31 = sphi 0, %s29
      %s32 = sphi 0, %s30
      %s42 = sphi 0, %s44
      %s45 = sphi 0, %s42
      %s46 = sphi 0, %s45
      %s62 = sphi 0, %s46
      %s70 = sphi 0, %s72
      %s73 = sphi 0, %s70
      %s74 = sphi 0, %s73
      %s90 = sphi 0, %s74
    $region4: #{tpu_custom_call.1} parent=1 // loop_header_branch
      %23 = sbr.rel (%p21) target = $region8
    $region5: #{tpu_custom_call.1} parent=1 // loop_body
      %s25 = ssub.s32 %s20, 1
      %s26 = ssub.s32 %s20, 2
      %s33 = sadd.s32 1, %s28
      %p34 = scmp.ge.s32.totalorder %s33, 2
      %s35 = scalar_select %p34, 0, %s33
      %s36 = sadd.s32 1, %s27
      %s37 = scalar_select %p34, %s36, %s27
      %p38 = scmp.ge.s32.totalorder %s37, 1
      %s39 = scalar_select %p38, 0, %s37
      %s40 = ssub.s32 %s27, %s39
      %p41 = scmp.eq.s32.totalorder %s40, 0
      %s43 = sadd.s32 %s42, 1
      %s44 = scalar_select %p41, %s42, %s43
      %p47 = pneg %p41
      %p48 = scmp.eq.s32.totalorder %s20, 1
      %p49 = por %p47, %p48
      %p50 = scmp.ne.s32.totalorder %s42, %s45
      %p51 = scmp.eq.s32.totalorder %s20, 0
      %p52 = por %p50, %p51
      %p53 = scmp.ne.s32.totalorder %s42, %s45
      %p54 = scmp.eq.s32.totalorder %s25, 1
      %p55 = por %p53, %p54
      %p56 = scmp.ne.s32.totalorder %s45, %s46
      %p57 = scmp.eq.s32.totalorder %s25, 0
      %p58 = por %p56, %p57
      %p59 = scmp.ne.s32.totalorder %s45, %s46
      %p60 = scmp.eq.s32.totalorder %s26, 1
      %p61 = por %p59, %p60
      %p63 = scmp.ne.s32.totalorder %s46, %s62
      %p64 = scmp.eq.s32.totalorder %s26, 0
      %p65 = por %p63, %p64
      %s66 = ssub.s32 %s28, %s35
      %s67 = ssub.s32 %s27, %s39
      %s68 = sor.u32 %s66, %s67
      %p69 = scmp.eq.s32.totalorder %s68, 0
      %s71 = sadd.s32 %s70, 1
      %s72 = scalar_select %p69, %s70, %s71
      %p75 = pneg %p69
      %p76 = scmp.eq.s32.totalorder %s20, 1
      %p77 = por %p75, %p76
      %p78 = scmp.ne.s32.totalorder %s70, %s73
      %p79 = scmp.eq.s32.totalorder %s20, 0
      %p80 = por %p78, %p79
      %p81 = scmp.ne.s32.totalorder %s70, %s73
      %p82 = scmp.eq.s32.totalorder %s25, 1
      %p83 = por %p81, %p82
      %p84 = scmp.ne.s32.totalorder %s73, %s74
      %p85 = scmp.eq.s32.totalorder %s25, 0
      %p86 = por %p84, %p85
      %p87 = scmp.ne.s32.totalorder %s73, %s74
      %p88 = scmp.eq.s32.totalorder %s26, 1
      %p89 = por %p87, %p88
      %p91 = scmp.ne.s32.totalorder %s74, %s90
      %p92 = scmp.eq.s32.totalorder %s26, 0
      %p93 = por %p91, %p92
      %p94 = scmp.le.s32.totalorder 1, %s20
      %p95 = scmp.lt.s32.totalorder %s20, 3
      %p96 = pnand %p94, %p95
      %p97 = pneg %p96
      // Predicated region
      $region9: #{tpu_custom_call.1} parent=5 // pred_check
        _
      $region10: #{tpu_custom_call.1} parent=5 // pred_check_branch
        %99 = sbr.rel (%p96) target = $region12
      $region11: #{tpu_custom_call.1} parent=5 // pred_region
        %s100 = ssub.s32 %s20, 1
        // Predicated region
        $region13: #{tpu_custom_call.1} parent=11 // pred_check
          %p101 = pneg %p58
        $region14: #{tpu_custom_call.1} parent=11 // pred_check_branch
          %103 = sbr.rel (%p101) target = $region16
        $region15: #{tpu_custom_call.1} parent=11 // pred_region
          %105 = vsyncadd [#allocation5], 0
          %s106 = smul.addr %s29, 8
          %s107 = scalar_lea.hbm %s1, %s106
          %s108 = sshll.u32 %s107, 4
          %s109 = int_to_ptr.hbm [resolvable:$true] %s108
          %s110 = sshll.u32 [#allocation4], 4
          %s111 = int_to_ptr.vmem [resolvable:$true] %s110
          %116 = dma.hbm_to_vmem [thread:$0]  %s109, 3328, %s111, [#allocation5], 128, 128, 8
        $region16: #{tpu_custom_call.1} parent=11 // pred_fallthru
          _
      $region12: #{tpu_custom_call.1} parent=5 // pred_fallthru
        _
      %p117 = scmp.lt.s32.totalorder %s20, 2
      // Predicated region
      $region17: #{tpu_custom_call.1} parent=5 // pred_check
        %p118 = pneg %p117
      $region18: #{tpu_custom_call.1} parent=5 // pred_check_branch
        %120 = sbr.rel (%p118) target = $region20
      $region19: #{tpu_custom_call.1} parent=5 // pred_region
        _
      $region20: #{tpu_custom_call.1} parent=5 // pred_fallthru
        _
      %p121 = scmp.le.s32.totalorder 1, %s20
      %p122 = scmp.lt.s32.totalorder %s20, 3
      %p123 = pnand %p121, %p122
      %p124 = pneg %p123
      // Predicated region
      $region21: #{tpu_custom_call.1} parent=5 // pred_check
        _
      $region22: #{tpu_custom_call.1} parent=5 // pred_check_branch
        %126 = sbr.rel (%p123) target = $region24
      $region23: #{tpu_custom_call.1} parent=5 // pred_region
        %s127 = ssub.s32 %s20, 1
        // Predicated region
        $region25: #{tpu_custom_call.1} parent=23 // pred_check
          %p128 = pneg %p58
        $region26: #{tpu_custom_call.1} parent=23 // pred_check_branch
          %130 = sbr.rel (%p128) target = $region28
        $region27: #{tpu_custom_call.1} parent=23 // pred_region
          %132 = dma.done [#allocation5], 3328
        $region28: #{tpu_custom_call.1} parent=23 // pred_fallthru
          _
        %p133 = pneg %p58
        %p134 = pneg %p55
        %p135 = pneg %p86
        %p136 = pneg %p83
        %s137 = sand.u32 %s73, 1
        %s138 = scalar_lea.sflag [#allocation6], %s137
        %s139 = sand.u32 %s73, 1
        %s140 = smul.addr %s139, 152
        %s141 = scalar_lea.vmem [#allocation7], %s140
        %s142 = smul.u32 19, %s30
        %s143 = smul.u32 %s30, 912
        loop: start=0, step=1, limit=19
        $region29: #{tpu_custom_call.1} parent=23 // loop_pre_header
          _
        $region30: #{tpu_custom_call.1} parent=23 // loop_header
          %s145 = sphi 0, %s149
          %p146 = scmp.ge.s32.totalorder %s145, 19
        $region31: #{tpu_custom_call.1} parent=23 // loop_header_branch
          %148 = sbr.rel (%p146) target = $region35
        $region32: #{tpu_custom_call.1} parent=23 // loop_body
          %s150 = smul.u32 %s145, 48
          %s151 = sadd.s32 %s143, %s150
          %s152 = sld [smem:[#allocation3 + %s151]]
          %s153 = scalar_lea.vmem [#allocation4], %s152
          %v154 = vld [vmem:[%s153] sm:$0x1]
          %s155 = sadd.s32 %s150, 1
          %s156 = sadd.s32 %s143, %s155
          %s157 = sld [smem:[#allocation3 + %s156]]
          %s158 = scalar_lea.vmem [#allocation4], %s157
          %v159 = vld [vmem:[%s158] sm:$0x1]
          %s160 = sadd.s32 %s150, 2
          %s161 = sadd.s32 %s143, %s160
          %s162 = sld [smem:[#allocation3 + %s161]]
          %s163 = scalar_lea.vmem [#allocation4], %s162
          %v164 = vld [vmem:[%s163] sm:$0x1]
          %s165 = sadd.s32 %s150, 3
          %s166 = sadd.s32 %s143, %s165
          %s167 = sld [smem:[#allocation3 + %s166]]
          %s168 = scalar_lea.vmem [#allocation4], %s167
          %v169 = vld [vmem:[%s168] sm:$0x1]
          %s170 = sadd.s32 %s150, 4
          %s171 = sadd.s32 %s143, %s170
          %s172 = sld [smem:[#allocation3 + %s171]]
          %s173 = scalar_lea.vmem [#allocation4], %s172
          %v174 = vld [vmem:[%s173] sm:$0x1]
          %s175 = sadd.s32 %s150, 5
          %s176 = sadd.s32 %s143, %s175
          %s177 = sld [smem:[#allocation3 + %s176]]
          %s178 = scalar_lea.vmem [#allocation4], %s177
          %v179 = vld [vmem:[%s178] sm:$0x1]
          %v180 = vmax.f32 %v154, %v159
          %v181 = vmax.f32 %v164, %v169
          %v182 = vmax.f32 %v174, %v179
          %v183 = vmax.f32 %v180, %v181
          %v184 = vmax.f32 %v183, %v182
          %s185 = smul.u32 %s145, 8
          %s186 = sadd.s32 %s185, 1
          %s187 = smul.u32 %s186, 6
          %s188 = sadd.s32 %s143, %s187
          %s189 = sld [smem:[#allocation3 + %s188]]
          %s190 = scalar_lea.vmem [#allocation4], %s189
          %v191 = vld [vmem:[%s190] sm:$0x1]
          %s192 = sadd.s32 %s187, 1
          %s193 = sadd.s32 %s143, %s192
          %s194 = sld [smem:[#allocation3 + %s193]]
          %s195 = scalar_lea.vmem [#allocation4], %s194
          %v196 = vld [vmem:[%s195] sm:$0x1]
          %s197 = sadd.s32 %s187, 2
          %s198 = sadd.s32 %s143, %s197
          %s199 = sld [smem:[#allocation3 + %s198]]
          %s200 = scalar_lea.vmem [#allocation4], %s199
          %v201 = vld [vmem:[%s200] sm:$0x1]
          %s202 = sadd.s32 %s187, 3
          %s203 = sadd.s32 %s143, %s202
          %s204 = sld [smem:[#allocation3 + %s203]]
          %s205 = scalar_lea.vmem [#allocation4], %s204
          %v206 = vld [vmem:[%s205] sm:$0x1]
          %s207 = sadd.s32 %s187, 4
          %s208 = sadd.s32 %s143, %s207
          %s209 = sld [smem:[#allocation3 + %s208]]
          %s210 = scalar_lea.vmem [#allocation4], %s209
          %v211 = vld [vmem:[%s210] sm:$0x1]
          %s212 = sadd.s32 %s187, 5
          %s213 = sadd.s32 %s143, %s212
          %s214 = sld [smem:[#allocation3 + %s213]]
          %s215 = scalar_lea.vmem [#allocation4], %s214
          %v216 = vld [vmem:[%s215] sm:$0x1]
          %v217 = vmax.f32 %v191, %v196
          %v218 = vmax.f32 %v201, %v206
          %v219 = vmax.f32 %v211, %v216
          %v220 = vmax.f32 %v217, %v218
          %v221 = vmax.f32 %v220, %v219
          %s222 = sadd.s32 %s185, 2
          %s223 = smul.u32 %s222, 6
          %s224 = sadd.s32 %s143, %s223
          %s225 = sld [smem:[#allocation3 + %s224]]
          %s226 = scalar_lea.vmem [#allocation4], %s225
          %v227 = vld [vmem:[%s226] sm:$0x1]
          %s228 = sadd.s32 %s223, 1
          %s229 = sadd.s32 %s143, %s228
          %s230 = sld [smem:[#allocation3 + %s229]]
          %s231 = scalar_lea.vmem [#allocation4], %s230
          %v232 = vld [vmem:[%s231] sm:$0x1]
          %s233 = sadd.s32 %s223, 2
          %s234 = sadd.s32 %s143, %s233
          %s235 = sld [smem:[#allocation3 + %s234]]
          %s236 = scalar_lea.vmem [#allocation4], %s235
          %v237 = vld [vmem:[%s236] sm:$0x1]
          %s238 = sadd.s32 %s223, 3
          %s239 = sadd.s32 %s143, %s238
          %s240 = sld [smem:[#allocation3 + %s239]]
          %s241 = scalar_lea.vmem [#allocation4], %s240
          %v242 = vld [vmem:[%s241] sm:$0x1]
          %s243 = sadd.s32 %s223, 4
          %s244 = sadd.s32 %s143, %s243
          %s245 = sld [smem:[#allocation3 + %s244]]
          %s246 = scalar_lea.vmem [#allocation4], %s245
          %v247 = vld [vmem:[%s246] sm:$0x1]
          %s248 = sadd.s32 %s223, 5
          %s249 = sadd.s32 %s143, %s248
          %s250 = sld [smem:[#allocation3 + %s249]]
          %s251 = scalar_lea.vmem [#allocation4], %s250
          %v252 = vld [vmem:[%s251] sm:$0x1]
          %v253 = vmax.f32 %v227, %v232
          %v254 = vmax.f32 %v237, %v242
          %v255 = vmax.f32 %v247, %v252
          %v256 = vmax.f32 %v253, %v254
          %v257 = vmax.f32 %v256, %v255
          %s258 = sadd.s32 %s185, 3
          %s259 = smul.u32 %s258, 6
          %s260 = sadd.s32 %s143, %s259
          %s261 = sld [smem:[#allocation3 + %s260]]
          %s262 = scalar_lea.vmem [#allocation4], %s261
          %v263 = vld [vmem:[%s262] sm:$0x1]
          %s264 = sadd.s32 %s259, 1
          %s265 = sadd.s32 %s143, %s264
          %s266 = sld [smem:[#allocation3 + %s265]]
          %s267 = scalar_lea.vmem [#allocation4], %s266
          %v268 = vld [vmem:[%s267] sm:$0x1]
          %s269 = sadd.s32 %s259, 2
          %s270 = sadd.s32 %s143, %s269
          %s271 = sld [smem:[#allocation3 + %s270]]
          %s272 = scalar_lea.vmem [#allocation4], %s271
          %v273 = vld [vmem:[%s272] sm:$0x1]
          %s274 = sadd.s32 %s259, 3
          %s275 = sadd.s32 %s143, %s274
          %s276 = sld [smem:[#allocation3 + %s275]]
          %s277 = scalar_lea.vmem [#allocation4], %s276
          %v278 = vld [vmem:[%s277] sm:$0x1]
          %s279 = sadd.s32 %s259, 4
          %s280 = sadd.s32 %s143, %s279
          %s281 = sld [smem:[#allocation3 + %s280]]
          %s282 = scalar_lea.vmem [#allocation4], %s281
          %v283 = vld [vmem:[%s282] sm:$0x1]
          %s284 = sadd.s32 %s259, 5
          %s285 = sadd.s32 %s143, %s284
          %s286 = sld [smem:[#allocation3 + %s285]]
          %s287 = scalar_lea.vmem [#allocation4], %s286
          %v288 = vld [vmem:[%s287] sm:$0x1]
          %v289 = vmax.f32 %v263, %v268
          %v290 = vmax.f32 %v273, %v278
          %v291 = vmax.f32 %v283, %v288
          %v292 = vmax.f32 %v289, %v290
          %v293 = vmax.f32 %v292, %v291
          %s294 = sadd.s32 %s185, 4
          %s295 = smul.u32 %s294, 6
          %s296 = sadd.s32 %s143, %s295
          %s297 = sld [smem:[#allocation3 + %s296]]
          %s298 = scalar_lea.vmem [#allocation4], %s297
          %v299 = vld [vmem:[%s298] sm:$0x1]
          %s300 = sadd.s32 %s295, 1
          %s301 = sadd.s32 %s143, %s300
          %s302 = sld [smem:[#allocation3 + %s301]]
          %s303 = scalar_lea.vmem [#allocation4], %s302
          %v304 = vld [vmem:[%s303] sm:$0x1]
          %s305 = sadd.s32 %s295, 2
          %s306 = sadd.s32 %s143, %s305
          %s307 = sld [smem:[#allocation3 + %s306]]
          %s308 = scalar_lea.vmem [#allocation4], %s307
          %v309 = vld [vmem:[%s308] sm:$0x1]
          %s310 = sadd.s32 %s295, 3
          %s311 = sadd.s32 %s143, %s310
          %s312 = sld [smem:[#allocation3 + %s311]]
          %s313 = scalar_lea.vmem [#allocation4], %s312
          %v314 = vld [vmem:[%s313] sm:$0x1]
          %s315 = sadd.s32 %s295, 4
          %s316 = sadd.s32 %s143, %s315
          %s317 = sld [smem:[#allocation3 + %s316]]
          %s318 = scalar_lea.vmem [#allocation4], %s317
          %v319 = vld [vmem:[%s318] sm:$0x1]
          %s320 = sadd.s32 %s295, 5
          %s321 = sadd.s32 %s143, %s320
          %s322 = sld [smem:[#allocation3 + %s321]]
          %s323 = scalar_lea.vmem [#allocation4], %s322
          %v324 = vld [vmem:[%s323] sm:$0x1]
          %v325 = vmax.f32 %v299, %v304
          %v326 = vmax.f32 %v309, %v314
          %v327 = vmax.f32 %v319, %v324
          %v328 = vmax.f32 %v325, %v326
          %v329 = vmax.f32 %v328, %v327
          %s330 = sadd.s32 %s185, 5
          %s331 = smul.u32 %s330, 6
          %s332 = sadd.s32 %s143, %s331
          %s333 = sld [smem:[#allocation3 + %s332]]
          %s334 = scalar_lea.vmem [#allocation4], %s333
          %v335 = vld [vmem:[%s334] sm:$0x1]
          %s336 = sadd.s32 %s331, 1
          %s337 = sadd.s32 %s143, %s336
          %s338 = sld [smem:[#allocation3 + %s337]]
          %s339 = scalar_lea.vmem [#allocation4], %s338
          %v340 = vld [vmem:[%s339] sm:$0x1]
          %s341 = sadd.s32 %s331, 2
          %s342 = sadd.s32 %s143, %s341
          %s343 = sld [smem:[#allocation3 + %s342]]
          %s344 = scalar_lea.vmem [#allocation4], %s343
          %v345 = vld [vmem:[%s344] sm:$0x1]
          %s346 = sadd.s32 %s331, 3
          %s347 = sadd.s32 %s143, %s346
          %s348 = sld [smem:[#allocation3 + %s347]]
          %s349 = scalar_lea.vmem [#allocation4], %s348
          %v350 = vld [vmem:[%s349] sm:$0x1]
          %s351 = sadd.s32 %s331, 4
          %s352 = sadd.s32 %s143, %s351
          %s353 = sld [smem:[#allocation3 + %s352]]
          %s354 = scalar_lea.vmem [#allocation4], %s353
          %v355 = vld [vmem:[%s354] sm:$0x1]
          %s356 = sadd.s32 %s331, 5
          %s357 = sadd.s32 %s143, %s356
          %s358 = sld [smem:[#allocation3 + %s357]]
          %s359 = scalar_lea.vmem [#allocation4], %s358
          %v360 = vld [vmem:[%s359] sm:$0x1]
          %v361 = vmax.f32 %v335, %v340
          %v362 = vmax.f32 %v345, %v350
          %v363 = vmax.f32 %v355, %v360
          %v364 = vmax.f32 %v361, %v362
          %v365 = vmax.f32 %v364, %v363
          %s366 = sadd.s32 %s185, 6
          %s367 = smul.u32 %s366, 6
          %s368 = sadd.s32 %s143, %s367
          %s369 = sld [smem:[#allocation3 + %s368]]
          %s370 = scalar_lea.vmem [#allocation4], %s369
          %v371 = vld [vmem:[%s370] sm:$0x1]
          %s372 = sadd.s32 %s367, 1
          %s373 = sadd.s32 %s143, %s372
          %s374 = sld [smem:[#allocation3 + %s373]]
          %s375 = scalar_lea.vmem [#allocation4], %s374
          %v376 = vld [vmem:[%s375] sm:$0x1]
          %s377 = sadd.s32 %s367, 2
          %s378 = sadd.s32 %s143, %s377
          %s379 = sld [smem:[#allocation3 + %s378]]
          %s380 = scalar_lea.vmem [#allocation4], %s379
          %v381 = vld [vmem:[%s380] sm:$0x1]
          %s382 = sadd.s32 %s367, 3
          %s383 = sadd.s32 %s143, %s382
          %s384 = sld [smem:[#allocation3 + %s383]]
          %s385 = scalar_lea.vmem [#allocation4], %s384
          %v386 = vld [vmem:[%s385] sm:$0x1]
          %s387 = sadd.s32 %s367, 4
          %s388 = sadd.s32 %s143, %s387
          %s389 = sld [smem:[#allocation3 + %s388]]
          %s390 = scalar_lea.vmem [#allocation4], %s389
          %v391 = vld [vmem:[%s390] sm:$0x1]
          %s392 = sadd.s32 %s367, 5
          %s393 = sadd.s32 %s143, %s392
          %s394 = sld [smem:[#allocation3 + %s393]]
          %s395 = scalar_lea.vmem [#allocation4], %s394
          %v396 = vld [vmem:[%s395] sm:$0x1]
          %v397 = vmax.f32 %v371, %v376
          %v398 = vmax.f32 %v381, %v386
          %v399 = vmax.f32 %v391, %v396
          %v400 = vmax.f32 %v397, %v398
          %v401 = vmax.f32 %v400, %v399
          %s402 = sadd.s32 %s185, 7
          %s403 = smul.u32 %s402, 6
          %s404 = sadd.s32 %s143, %s403
          %s405 = sld [smem:[#allocation3 + %s404]]
          %s406 = scalar_lea.vmem [#allocation4], %s405
          %v407 = vld [vmem:[%s406] sm:$0x1]
          %s408 = sadd.s32 %s403, 1
          %s409 = sadd.s32 %s143, %s408
          %s410 = sld [smem:[#allocation3 + %s409]]
          %s411 = scalar_lea.vmem [#allocation4], %s410
          %v412 = vld [vmem:[%s411] sm:$0x1]
          %s413 = sadd.s32 %s403, 2
          %s414 = sadd.s32 %s143, %s413
          %s415 = sld [smem:[#allocation3 + %s414]]
          %s416 = scalar_lea.vmem [#allocation4], %s415
          %v417 = vld [vmem:[%s416] sm:$0x1]
          %s418 = sadd.s32 %s403, 3
          %s419 = sadd.s32 %s143, %s418
          %s420 = sld [smem:[#allocation3 + %s419]]
          %s421 = scalar_lea.vmem [#allocation4], %s420
          %v422 = vld [vmem:[%s421] sm:$0x1]
          %s423 = sadd.s32 %s403, 4
          %s424 = sadd.s32 %s143, %s423
          %s425 = sld [smem:[#allocation3 + %s424]]
          %s426 = scalar_lea.vmem [#allocation4], %s425
          %v427 = vld [vmem:[%s426] sm:$0x1]
          %s428 = sadd.s32 %s403, 5
          %s429 = sadd.s32 %s143, %s428
          %s430 = sld [smem:[#allocation3 + %s429]]
          %s431 = scalar_lea.vmem [#allocation4], %s430
          %v432 = vld [vmem:[%s431] sm:$0x1]
          %v433 = vmax.f32 %v407, %v412
          %v434 = vmax.f32 %v417, %v422
          %v435 = vmax.f32 %v427, %v432
          %v436 = vmax.f32 %v433, %v434
          %v437 = vmax.f32 %v436, %v435
          %v439 = vrot.slane %v221, 7
          %v442 = vrot.slane %v257, 6
          %v445 = vrot.slane %v293, 5
          %v448 = vrot.slane %v329, 4
          %v451 = vrot.slane %v365, 3
          %v454 = vrot.slane %v401, 2
          %v457 = vrot.slane %v437, 1
          %vm459 = vcmask 1040384
          %v460 = vsel %vm459, %v184, %v439
          %vm461 = vcmask 1041408
          %v462 = vsel %vm461, %v460, %v442
          %vm463 = vcmask 1042432
          %v464 = vsel %vm463, %v462, %v445
          %vm465 = vcmask 1043456
          %v466 = vsel %vm465, %v464, %v448
          %vm467 = vcmask 1044480
          %v468 = vsel %vm467, %v466, %v451
          %vm469 = vcmask 1045504
          %v470 = vsel %vm469, %v468, %v454
          %vm471 = vcmask 1046528
          %v472 = vsel %vm471, %v470, %v457
          %s473 = scalar_lea.vmem %s141, %s185 [#allocation7]
          %474 = vst [vmem:[%s473] sm:$0xff] %v472
        $region33: #{tpu_custom_call.1} parent=23 // loop_footer
          %s149 = sadd.s32 1, %s145
        $region34: #{tpu_custom_call.1} parent=23 // loop_footer_branch
          %144 = sbr.rel target = $region30
        $region35: #{tpu_custom_call.1} parent=23 // loop_exit
          _
        %s475 = sand.u32 %s73, 1
        %s476 = scalar_lea.sflag [#allocation6], %s475
        %s477 = sand.u32 %s73, 1
        %s478 = smul.addr %s477, 152
        %s479 = scalar_lea.vmem [#allocation7], %s478
        // Predicated region
        $region36: #{tpu_custom_call.1} parent=23 // pred_check
          %p480 = pneg %p83
        $region37: #{tpu_custom_call.1} parent=23 // pred_check_branch
          %482 = sbr.rel (%p480) target = $region39
        $region38: #{tpu_custom_call.1} parent=23 // pred_region
          %s483 = smul.u32 19, %s30
          %485 = vsyncadd %s476, 0
          %s486 = sadd.s32 %s29, %s483
          %s487 = smul.addr %s486, 8
          %s488 = scalar_lea.hbm %s2, %s487
          %s489 = sshll.u32 %s479, 4
          %s490 = int_to_ptr.vmem [resolvable:$true] %s489
          %s491 = sshll.u32 %s488, 4
          %s492 = int_to_ptr.hbm [resolvable:$true] %s491
          %497 = dma.vmem_to_hbm [thread:$0]  %s490, 2432, %s492, %s476, 128, 128, 8
        $region39: #{tpu_custom_call.1} parent=23 // pred_fallthru
          _
      $region24: #{tpu_custom_call.1} parent=5 // pred_fallthru
        _
      %p498 = scmp.le.s32.totalorder 2, %s20
      // Predicated region
      $region40: #{tpu_custom_call.1} parent=5 // pred_check
        %p499 = pneg %p498
      $region41: #{tpu_custom_call.1} parent=5 // pred_check_branch
        %501 = sbr.rel (%p499) target = $region43
      $region42: #{tpu_custom_call.1} parent=5 // pred_region
        %s502 = ssub.s32 %s20, 2
        // Predicated region
        $region44: #{tpu_custom_call.1} parent=42 // pred_check
          %p503 = pneg %p89
        $region45: #{tpu_custom_call.1} parent=42 // pred_check_branch
          %505 = sbr.rel (%p503) target = $region47
        $region46: #{tpu_custom_call.1} parent=42 // pred_region
          %s506 = sand.u32 %s74, 1
          %s507 = scalar_lea.sflag [#allocation6], %s506
          %s508 = sand.u32 %s74, 1
          %s509 = smul.addr %s508, 152
          %s510 = scalar_lea.vmem [#allocation7], %s509
          %512 = dma.done %s507, 2432
        $region47: #{tpu_custom_call.1} parent=42 // pred_fallthru
          _
      $region43: #{tpu_custom_call.1} parent=5 // pred_fallthru
        _
    $region6: #{tpu_custom_call.1} parent=1 // loop_footer
      %s24 = sadd.s32 1, %s20
    $region7: #{tpu_custom_call.1} parent=1 // loop_footer_branch
      %19 = sbr.rel target = $region3
    $region8: #{tpu_custom_call.1} parent=1 // loop_exit
      _
    %513 = vsyncpa [#allocation5], 1
    %s514 = scalar_lea.sflag [#allocation5], 1
    %515 = vsyncpa %s514, 1
    %516 = vsyncpa [#allocation6], 1
    %s517 = scalar_lea.sflag [#allocation6], 1
    %518 = vsyncpa %s517, 1

</llo_original>
